<compile_context>
chip_gen: v7x
topology: tpu7x:2x2x1
jax: 0.10.0
libtpu: 0.0.40
codegen_flags: <defaults>
</compile_context>

<pallas_src>
import functools

import numpy as np
import jax
import jax.numpy as jnp
from jax.experimental import pallas as pl
from jax.experimental.pallas import tpu as pltpu


def _round_up(x, m):
    return (x + m - 1) // m * m


def build_fused_table(type_table, token_table, table_dtype=jnp.bfloat16):
    """Fused block-diagonal table: rows [0, V_type) carry the type table, rows
    [V_type, V_type+V_tok) the token table; padding rows/cols are zero.  Build
    ONCE per model and reuse across forward calls (or jit the caller so XLA
    const-folds it)."""
    v_type, d_type = type_table.shape
    v_tok, d_tok = token_table.shape
    d_out_pad = _round_up(d_type + d_tok, 128)
    v_total_pad = _round_up(v_type + v_tok, 128)
    fused = jnp.zeros((v_total_pad, d_out_pad), table_dtype)
    fused = fused.at[:v_type, :d_type].set(type_table.astype(table_dtype))
    fused = fused.at[v_type:v_type + v_tok, d_type:d_type + d_tok].set(
        token_table.astype(table_dtype))
    return fused


def _ast_node_embed_kernel(ids_ref, table_ref, out_ref, *, counts_dtype):
    """ids_ref:   [T, 1+S] int32 (col 0 = type id, cols 1.. = offset token ids,
                  -1 = padding -> contributes exact zeros).
    table_ref: [V_total_pad, D_out_pad] fused block-diagonal table.
    out_ref:   [T, D_out_pad] (one lane-dense store)."""
    ids = ids_ref[...]                                        # [T, 1+S] i32
    t, k = ids.shape
    v = table_ref.shape[0]

    # One 2-D iota, K unrolled lane-parallel compares accumulated into a single
    # [T, V] counts buffer.  No [T, K, V] intermediate, no XLU reduction.
    lane = jax.lax.broadcasted_iota(jnp.int32, (t, v), 1)     # [T, V]
    counts = (lane == ids[:, 0:1]).astype(counts_dtype)
    for j in range(1, k):                                     # K tiny & static
        counts = counts + (lane == ids[:, j:j + 1]).astype(counts_dtype)

    # counts @ blockdiag(TypeTable, TokenTable) == concat(type_emb, sum tok_emb)
    out_ref[...] = jnp.dot(
        counts.astype(table_ref.dtype), table_ref[...],
        preferred_element_type=jnp.float32).astype(out_ref.dtype)


def ast_node_embedding_pallas(node_type_index, node_sub_token_ids,
                              type_table, token_table, *,
                              fused_table=None, node_tile=256,
                              out_dtype=jnp.bfloat16,
                              table_dtype=jnp.bfloat16,
                              counts_dtype=jnp.bfloat16):
    """Batched node embedding: [N], [N,S] -> [N, D_type + D_tok].

    counts_dtype=jnp.bfloat16 is exact for counts <= 256 and is the fast path
    on v6e/v7x; use jnp.float32 on v5e (no bf16 VALU).
    """
    n = int(node_type_index.shape[0])
    s = int(node_sub_token_ids.shape[1])
    v_type, d_type = type_table.shape
    v_tok, d_tok = token_table.shape
    d_out = d_type + d_tok
    if counts_dtype == jnp.bfloat16:
        assert s + 1 <= 256, "multiplicity counts must stay exact in bf16"

    if fused_table is None:
        fused_table = build_fused_table(type_table, token_table, table_dtype)
    v_total_pad, d_out_pad = fused_table.shape
    table_dtype = fused_table.dtype

    n_pad = _round_up(max(n, 1), node_tile)
    s1 = s + 1

    # Combined index matrix built in ONE pass (on host if inputs are numpy ->
    # a single device transfer).  Pad rows get -1 (match nothing -> zero row).
    host = isinstance(node_type_index, np.ndarray) and isinstance(
        node_sub_token_ids, np.ndarray)
    xp = np if host else jnp
    ids = xp.concatenate(
        [xp.asarray(node_type_index, xp.int32).reshape(n, 1),
         xp.asarray(node_sub_token_ids, xp.int32) + v_type], axis=1)
    ids = xp.pad(ids, ((0, n_pad - n), (0, 0)), constant_values=-1)

    # Explicit scoped-VMEM budget derived from the real footprint.
    isz = lambda dt: jnp.dtype(dt).itemsize
    ids_buf = node_tile * _round_up(s1, 128) * 4            # lane-padded i32
    table_buf = v_total_pad * d_out_pad * isz(table_dtype)
    out_buf = node_tile * d_out_pad * isz(out_dtype)
    counts_buf = node_tile * v_total_pad * (isz(counts_dtype) + 4)  # counts+iota
    est = 2 * ids_buf + 2 * table_buf + 2 * out_buf + counts_buf
    vmem_limit = int(min(max(2 * est, 16 << 20), 64 << 20))

    kernel = functools.partial(_ast_node_embed_kernel, counts_dtype=counts_dtype)
    grid = (n_pad // node_tile,)   # NOTE: keep >= 2 steps on v7x for both TCs
    ids_spec = pl.BlockSpec((node_tile, s1), lambda i: (i, 0))
    out_spec = pl.BlockSpec((node_tile, d_out_pad), lambda i: (i, 0))

    def _make_call(single_buffer_table):
        if single_buffer_table:
            # Grid-invariant table -> one pipeline buffer is enough.
            table_spec = pl.BlockSpec((v_total_pad, d_out_pad),
                                      lambda i: (0, 0),
                                      pipeline_mode=pl.Buffered(1))
        else:
            table_spec = pl.BlockSpec((v_total_pad, d_out_pad),
                                      lambda i: (0, 0))
        return pl.pallas_call(
            kernel,
            out_shape=jax.ShapeDtypeStruct((n_pad, d_out_pad), out_dtype),
            grid=grid,
            in_specs=[ids_spec, table_spec],
            out_specs=out_spec,
            compiler_params=pltpu.CompilerParams(
                dimension_semantics=("parallel",),
                vmem_limit_bytes=vmem_limit),
        )

    try:
        out = _make_call(True)(ids, fused_table)
    except Exception:
        # pipeline_mode / Buffered(1) unsupported on this jax build -> fall back
        # to the default double-buffered table spec.
        out = _make_call(False)(ids, fused_table)

    return out[:n, :d_out]


def ast_node_embedding_forward(ast_nodes, type_table, token_table, *,
                               tree_lstm=True, fused_table=None, **kwargs):
    """Mirrors ASTNodeEmbedding.forward.

    tree_lstm=True : ast_nodes is {node_id: {'node_type_index': int,
                                             'node_sub_token_ids': [S] ints}}
    tree_lstm=False: ast_nodes is a list of such dicts; all nodes of all trees
                     are marshalled in one numpy pass and batched into ONE
                     pallas_call, then split back per tree.
    """
    trees = [ast_nodes] if tree_lstm else list(ast_nodes)

    all_ids, node_counts = [], []
    type_rows, sub_rows = [], []
    for nodes in trees:
        keys = list(nodes.keys())
        all_ids.append(keys)
        node_counts.append(len(keys))
        for k in keys:
            info = nodes[k]
            type_rows.append(int(info['node_type_index']))
            sub_rows.append(np.asarray(info['node_sub_token_ids'], np.int32))

    type_idx = np.asarray(type_rows, np.int32)
    sub_ids = np.stack(sub_rows, axis=0).astype(np.int32)

    emb = ast_node_embedding_pallas(type_idx, sub_ids, type_table, token_table,
                                    fused_table=fused_table, **kwargs)

    if tree_lstm:
        return all_ids[0], emb

    outs, off = [], 0
    for c in node_counts:
        outs.append(emb[off:off + c])
        off += c
    return all_ids, outs


def _reference(type_idx, sub_ids, type_table, token_table, table_dtype):
    """Pure-JAX reference using the same table quantization as the kernel."""
    tt = type_table.astype(table_dtype).astype(jnp.float32)
    kt = token_table.astype(table_dtype).astype(jnp.float32)
    te = tt[type_idx]                         # [N, D_type]
    se = kt[sub_ids].sum(axis=1)              # reduce_dim=0 per node -> [N, D_tok]
    return jnp.concatenate([te, se], axis=-1)


if __name__ == "__main__":
    key = jax.random.PRNGKey(0)
    k_type, k_tok, k_idx, k_sub = jax.random.split(key, 4)

    N_NODES = 8        # number of AST nodes
    N_SUBTOK = 4       # padded subtoken count per node
    V_TYPE = 16        # node-type vocab
    V_TOK = 48         # subtoken vocab
    D_TYPE = D_TOK = 64   # d_out = 128 -> naturally lane-dense output

    type_table = jax.random.normal(k_type, (V_TYPE, D_TYPE), jnp.float32)
    token_table = jax.random.normal(k_tok, (V_TOK, D_TOK), jnp.float32)
    node_type_index = jax.random.randint(k_idx, (N_NODES,), 0, V_TYPE, jnp.int32)
    node_sub_token_ids = jax.random.randint(
        k_sub, (N_NODES, N_SUBTOK), 0, V_TOK, jnp.int32)

    ref_bf16 = _reference(node_type_index, node_sub_token_ids,
                          type_table, token_table, jnp.bfloat16)

    # Host-side numpy copies for marshalling; fused table built ONCE.
    np_type = np.asarray(node_type_index)
    np_sub = np.asarray(node_sub_token_ids)
    fused = build_fused_table(type_table, token_table)

    # --- tree_lstm=True: one tree as a dict ---------------------------------
    ast_nodes = {
        int(i): {'node_type_index': int(np_type[i]),
                 'node_sub_token_ids': np_sub[i]}
        for i in range(N_NODES)
    }
    node_ids, embeddings = ast_node_embedding_forward(
        ast_nodes, type_table, token_table, tree_lstm=True, fused_table=fused)
    embeddings = jax.block_until_ready(embeddings)

    assert embeddings.shape == (N_NODES, D_TYPE + D_TOK), embeddings.shape
    assert embeddings.dtype == jnp.bfloat16
    err = float(jnp.max(jnp.abs(embeddings.astype(jnp.float32) - ref_bf16)))
    assert err < 6e-2, f"mismatch (tree_lstm=True): max abs err {err}"
    assert node_ids == list(range(N_NODES))

    # --- tree_lstm=False: list of trees, all nodes in ONE pallas_call --------
    trees = [
        {i: {'node_type_index': int(np_type[i]),
             'node_sub_token_ids': np_sub[i]} for i in range(3)},
        {i: {'node_type_index': int(np_type[i]),
             'node_sub_token_ids': np_sub[i]} for i in range(3, N_NODES)},
    ]
    ids_list, emb_list = ast_node_embedding_forward(
        trees, type_table, token_table, tree_lstm=False, fused_table=fused)
    emb_list = [jax.block_until_ready(e) for e in emb_list]

    assert ids_list == [list(range(3)), list(range(3, N_NODES))]
    cat = jnp.concatenate([e.astype(jnp.float32) for e in emb_list], axis=0)
    err2 = float(jnp.max(jnp.abs(cat - ref_bf16)))
    assert err2 < 6e-2, f"mismatch (tree_lstm=False): max abs err {err2}"

    # --- full-f32 variant (addresses bf16 table-quantization concern) --------
    out_f32 = ast_node_embedding_pallas(
        node_type_index, node_sub_token_ids, type_table, token_table,
        out_dtype=jnp.float32, table_dtype=jnp.float32,
        counts_dtype=jnp.float32)
    out_f32 = jax.block_until_ready(out_f32)
    ref_f32 = _reference(node_type_index, node_sub_token_ids,
                         type_table, token_table, jnp.float32)
    err3 = float(jnp.max(jnp.abs(out_f32 - ref_f32)))
    assert err3 < 5e-2, f"mismatch (f32 variant): max abs err {err3}"

    print("KERNEL_OK")
</pallas_src>

<mosaic_0001>
module attributes {stable_mosaic.version = 11 : i64} {
  func.func @_ast_node_embed_kernel(%arg0: i32, %arg1: memref<256x5xi32, #tpu.memory_space<vmem>>, %arg2: memref<128x128xbf16, #tpu.memory_space<vmem>>, %arg3: memref<256x128xbf16, #tpu.memory_space<vmem>>) attributes {dimension_semantics = [#tpu.dimension_semantics<parallel>], iteration_bounds = array<i64: 1>, scalar_prefetch = 0 : i64, scratch_operands = 0 : i64, tpu.core_type = #tpu.core_type<tc>, window_params = [{transform_indices = @transform_0, window_bounds = array<i64: 256, 5>}, {pipeline_mode = #tpu.pipeline_mode<synchronous>, transform_indices = @transform_1, window_bounds = array<i64: 128, 128>}, {transform_indices = @transform_2, window_bounds = array<i64: 256, 128>}]} {
    %c0 = arith.constant 0 : index
    %c0_0 = arith.constant 0 : index
    %0 = vector.load %arg1[%c0, %c0_0] : memref<256x5xi32, #tpu.memory_space<vmem>>, vector<256x5xi32>
    %1 = tpu.iota {dimensions = array<i32: 1>} : vector<256x128xi32>
    %2 = vector.extract_strided_slice %0 {offsets = [0, 0], sizes = [256, 1], strides = [1, 1]} : vector<256x5xi32> to vector<256x1xi32>
    %3 = vector.broadcast %2 : vector<256x1xi32> to vector<256x128xi32>
    %4 = arith.cmpi eq, %1, %3 : vector<256x128xi32>
    %5 = arith.extui %4 : vector<256x128xi1> to vector<256x128xi32>
    %6 = arith.sitofp %5 : vector<256x128xi32> to vector<256x128xf32>
    %7 = arith.truncf %6 : vector<256x128xf32> to vector<256x128xbf16>
    %8 = vector.extract_strided_slice %0 {offsets = [0, 1], sizes = [256, 1], strides = [1, 1]} : vector<256x5xi32> to vector<256x1xi32>
    %9 = vector.broadcast %8 : vector<256x1xi32> to vector<256x128xi32>
    %10 = arith.cmpi eq, %1, %9 : vector<256x128xi32>
    %11 = arith.extui %10 : vector<256x128xi1> to vector<256x128xi32>
    %12 = arith.sitofp %11 : vector<256x128xi32> to vector<256x128xf32>
    %13 = arith.truncf %12 : vector<256x128xf32> to vector<256x128xbf16>
    %14 = arith.addf %7, %13 : vector<256x128xbf16>
    %15 = vector.extract_strided_slice %0 {offsets = [0, 2], sizes = [256, 1], strides = [1, 1]} : vector<256x5xi32> to vector<256x1xi32>
    %16 = vector.broadcast %15 : vector<256x1xi32> to vector<256x128xi32>
    %17 = arith.cmpi eq, %1, %16 : vector<256x128xi32>
    %18 = arith.extui %17 : vector<256x128xi1> to vector<256x128xi32>
    %19 = arith.sitofp %18 : vector<256x128xi32> to vector<256x128xf32>
    %20 = arith.truncf %19 : vector<256x128xf32> to vector<256x128xbf16>
    %21 = arith.addf %14, %20 : vector<256x128xbf16>
    %22 = vector.extract_strided_slice %0 {offsets = [0, 3], sizes = [256, 1], strides = [1, 1]} : vector<256x5xi32> to vector<256x1xi32>
    %23 = vector.broadcast %22 : vector<256x1xi32> to vector<256x128xi32>
    %24 = arith.cmpi eq, %1, %23 : vector<256x128xi32>
    %25 = arith.extui %24 : vector<256x128xi1> to vector<256x128xi32>
    %26 = arith.sitofp %25 : vector<256x128xi32> to vector<256x128xf32>
    %27 = arith.truncf %26 : vector<256x128xf32> to vector<256x128xbf16>
    %28 = arith.addf %21, %27 : vector<256x128xbf16>
    %29 = vector.extract_strided_slice %0 {offsets = [0, 4], sizes = [256, 1], strides = [1, 1]} : vector<256x5xi32> to vector<256x1xi32>
    %30 = vector.broadcast %29 : vector<256x1xi32> to vector<256x128xi32>
    %31 = arith.cmpi eq, %1, %30 : vector<256x128xi32>
    %32 = arith.extui %31 : vector<256x128xi1> to vector<256x128xi32>
    %33 = arith.sitofp %32 : vector<256x128xi32> to vector<256x128xf32>
    %34 = arith.truncf %33 : vector<256x128xf32> to vector<256x128xbf16>
    %35 = arith.addf %28, %34 : vector<256x128xbf16>
    %c0_1 = arith.constant 0 : index
    %c0_2 = arith.constant 0 : index
    %36 = vector.load %arg2[%c0_1, %c0_2] : memref<128x128xbf16, #tpu.memory_space<vmem>>, vector<128x128xbf16>
    %cst = arith.constant dense<0.000000e+00> : vector<256x128xf32>
    %37 = tpu.matmul %35, %36, %cst {dimension_numbers = #tpu.dot_dimension_numbers<[1], [0], [0], [1], [0, 0, 1, 1], [], []>} : vector<256x128xbf16>, vector<128x128xbf16>, vector<256x128xf32> -> vector<256x128xf32>
    %38 = arith.truncf %37 : vector<256x128xf32> to vector<256x128xbf16>
    %c0_3 = arith.constant 0 : index
    %c0_4 = arith.constant 0 : index
    %39 = vector.load %arg3[%c0_3, %c0_4] : memref<256x128xbf16, #tpu.memory_space<vmem>>, vector<256x128xbf16>
    tpu.vector_store %arg3[%c0_3, %c0_4], %38 {strides = array<i32>} : memref<256x128xbf16, #tpu.memory_space<vmem>>, vector<256x128xbf16>,
    return
  }
  func.func @transform_0(%arg0: i32) -> (i32, i32) {
    %c0_i32 = arith.constant 0 : i32
    %c0_i32_0 = arith.constant 0 : i32
    return %arg0, %c0_i32 : i32, i32
  }
  func.func @transform_1(%arg0: i32) -> (i32, i32) {
    %c0_i32 = arith.constant 0 : i32
    %c0_i32_0 = arith.constant 0 : i32
    %c0_i32_1 = arith.constant 0 : i32
    return %c0_i32, %c0_i32_0 : i32, i32
  }
  func.func @transform_2(%arg0: i32) -> (i32, i32) {
    %c0_i32 = arith.constant 0 : i32
    %c0_i32_0 = arith.constant 0 : i32
    return %arg0, %c0_i32 : i32, i32
  }
}

module attributes {stable_mosaic.version = 11 : i64} {
  func.func @_ast_node_embed_kernel(%arg0: i32, %arg1: memref<256x5xi32, #tpu.memory_space<vmem>>, %arg2: memref<128x128xbf16, #tpu.memory_space<vmem>>, %arg3: memref<256x128xbf16, #tpu.memory_space<vmem>>) attributes {dimension_semantics = [#tpu.dimension_semantics<parallel>], iteration_bounds = array<i64: 1>, scalar_prefetch = 0 : i64, scratch_operands = 0 : i64, tpu.core_type = #tpu.core_type<tc>, window_params = [{transform_indices = @transform_0, window_bounds = array<i64: 256, 5>}, {pipeline_mode = #tpu.pipeline_mode<synchronous>, transform_indices = @transform_1, window_bounds = array<i64: 128, 128>}, {transform_indices = @transform_2, window_bounds = array<i64: 256, 128>}]} {
    %c0 = arith.constant 0 : index
    %c0_0 = arith.constant 0 : index
    %0 = vector.load %arg1[%c0, %c0_0] : memref<256x5xi32, #tpu.memory_space<vmem>>, vector<256x5xi32>
    %1 = tpu.iota {dimensions = array<i32: 1>} : vector<256x128xi32>
    %2 = vector.extract_strided_slice %0 {offsets = [0, 0], sizes = [256, 1], strides = [1, 1]} : vector<256x5xi32> to vector<256x1xi32>
    %3 = vector.broadcast %2 : vector<256x1xi32> to vector<256x128xi32>
    %4 = arith.cmpi eq, %1, %3 : vector<256x128xi32>
    %5 = arith.extui %4 : vector<256x128xi1> to vector<256x128xi32>
    %6 = arith.sitofp %5 : vector<256x128xi32> to vector<256x128xf32>
    %7 = arith.truncf %6 : vector<256x128xf32> to vector<256x128xbf16>
    %8 = vector.extract_strided_slice %0 {offsets = [0, 1], sizes = [256, 1], strides = [1, 1]} : vector<256x5xi32> to vector<256x1xi32>
    %9 = vector.broadcast %8 : vector<256x1xi32> to vector<256x128xi32>
    %10 = arith.cmpi eq, %1, %9 : vector<256x128xi32>
    %11 = arith.extui %10 : vector<256x128xi1> to vector<256x128xi32>
    %12 = arith.sitofp %11 : vector<256x128xi32> to vector<256x128xf32>
    %13 = arith.truncf %12 : vector<256x128xf32> to vector<256x128xbf16>
    %14 = arith.addf %7, %13 : vector<256x128xbf16>
    %15 = vector.extract_strided_slice %0 {offsets = [0, 2], sizes = [256, 1], strides = [1, 1]} : vector<256x5xi32> to vector<256x1xi32>
    %16 = vector.broadcast %15 : vector<256x1xi32> to vector<256x128xi32>
    %17 = arith.cmpi eq, %1, %16 : vector<256x128xi32>
    %18 = arith.extui %17 : vector<256x128xi1> to vector<256x128xi32>
    %19 = arith.sitofp %18 : vector<256x128xi32> to vector<256x128xf32>
    %20 = arith.truncf %19 : vector<256x128xf32> to vector<256x128xbf16>
    %21 = arith.addf %14, %20 : vector<256x128xbf16>
    %22 = vector.extract_strided_slice %0 {offsets = [0, 3], sizes = [256, 1], strides = [1, 1]} : vector<256x5xi32> to vector<256x1xi32>
    %23 = vector.broadcast %22 : vector<256x1xi32> to vector<256x128xi32>
    %24 = arith.cmpi eq, %1, %23 : vector<256x128xi32>
    %25 = arith.extui %24 : vector<256x128xi1> to vector<256x128xi32>
    %26 = arith.sitofp %25 : vector<256x128xi32> to vector<256x128xf32>
    %27 = arith.truncf %26 : vector<256x128xf32> to vector<256x128xbf16>
    %28 = arith.addf %21, %27 : vector<256x128xbf16>
    %29 = vector.extract_strided_slice %0 {offsets = [0, 4], sizes = [256, 1], strides = [1, 1]} : vector<256x5xi32> to vector<256x1xi32>
    %30 = vector.broadcast %29 : vector<256x1xi32> to vector<256x128xi32>
    %31 = arith.cmpi eq, %1, %30 : vector<256x128xi32>
    %32 = arith.extui %31 : vector<256x128xi1> to vector<256x128xi32>
    %33 = arith.sitofp %32 : vector<256x128xi32> to vector<256x128xf32>
    %34 = arith.truncf %33 : vector<256x128xf32> to vector<256x128xbf16>
    %35 = arith.addf %28, %34 : vector<256x128xbf16>
    %c0_1 = arith.constant 0 : index
    %c0_2 = arith.constant 0 : index
    %36 = vector.load %arg2[%c0_1, %c0_2] : memref<128x128xbf16, #tpu.memory_space<vmem>>, vector<128x128xbf16>
    %cst = arith.constant dense<0.000000e+00> : vector<256x128xf32>
    %37 = tpu.matmul %35, %36, %cst {dimension_numbers = #tpu.dot_dimension_numbers<[1], [0], [0], [1], [0, 0, 1, 1], [], []>} : vector<256x128xbf16>, vector<128x128xbf16>, vector<256x128xf32> -> vector<256x128xf32>
    %38 = arith.truncf %37 : vector<256x128xf32> to vector<256x128xbf16>
    %c0_3 = arith.constant 0 : index
    %c0_4 = arith.constant 0 : index
    %39 = vector.load %arg3[%c0_3, %c0_4] : memref<256x128xbf16, #tpu.memory_space<vmem>>, vector<256x128xbf16>
    tpu.vector_store %arg3[%c0_3, %c0_4], %38 {strides = array<i32>} : memref<256x128xbf16, #tpu.memory_space<vmem>>, vector<256x128xbf16>,
    return
  }
  func.func @transform_0(%arg0: i32) -> (i32, i32) {
    %c0_i32 = arith.constant 0 : i32
    %c0_i32_0 = arith.constant 0 : i32
    return %arg0, %c0_i32 : i32, i32
  }
  func.func @transform_1(%arg0: i32) -> (i32, i32) {
    %c0_i32 = arith.constant 0 : i32
    %c0_i32_0 = arith.constant 0 : i32
    %c0_i32_1 = arith.constant 0 : i32
    return %c0_i32, %c0_i32_0 : i32, i32
  }
  func.func @transform_2(%arg0: i32) -> (i32, i32) {
    %c0_i32 = arith.constant 0 : i32
    %c0_i32_0 = arith.constant 0 : i32
    return %arg0, %c0_i32 : i32, i32
  }
}

</mosaic_0001>

<llo_original>
// kernel: tpu_custom_call.1
$region0: #{tpu_custom_call.1}
  #allocation0 [shape = 'u32[]', space=smem, size = 0x4, offset = 0x4, fixed_abs, tag = 'smem constant byte address 0x4 - core index']
  #allocation1 [shape = 'u32[144,128]{1,0:T(1,128)}', space=vmem, size = 0x12000, scoped, tag = 'internal scratch']
  %s0 = inlined_call_operand.vmem [shape: s32[256,5], index: 0, kind: input, shape index: {}]
  %s1 = inlined_call_operand.vmem [shape: bf16[128,128], index: 1, kind: input, shape index: {}]
  %s2 = inlined_call_operand.hbm [shape: bf16[256,128], index: 2, kind: output, shape index: {}]
  %s3 = sld [smem:[#allocation0]]
  $region18: #{tpu_custom_call.1} parent=0
    _
  %s5 = ssub.s32 1, %s3
  %s6 = scalar_select 0, %s5, %s3
  $region1: #{tpu_custom_call.1} parent=0
    #allocation2 [shape = 'u8[65536]{0}', space=vmem, size = 0x10000, scoped, tag = 'output window, operand 0, single buffered']
    #allocation3 [shape = 's32[1]{0}', space=sflag, size = 0x4, scoped, tag = 'scoped memory for tpu_custom_call.1']
    %7 = vsyncpa [#allocation3], 0
    // Predicated region
    $region2: #{tpu_custom_call.1} parent=1 // pred_check
      _
    $region3: #{tpu_custom_call.1} parent=1 // pred_check_branch
      %9 = sbr.rel (0) target = $region5
    $region4: #{tpu_custom_call.1} parent=1 // pred_region
      _
    $region5: #{tpu_custom_call.1} parent=1 // pred_fallthru
      _
    // Predicated region
    $region6: #{tpu_custom_call.1} parent=1 // pred_check
      _
    $region7: #{tpu_custom_call.1} parent=1 // pred_check_branch
      %11 = sbr.rel (0) target = $region9
    $region8: #{tpu_custom_call.1} parent=1 // pred_region
      _
    $region9: #{tpu_custom_call.1} parent=1 // pred_fallthru
      _
    %v13 = vld [vmem:[%s0] sm:$0xff]
    %v14 = vld [vmem:[%s0 + $0x8] sm:$0xff]
    %v15 = vld [vmem:[%s0 + $0x10] sm:$0xff]
    %v16 = vld [vmem:[%s0 + $0x18] sm:$0xff]
    %v17 = vld [vmem:[%s0 + $0x20] sm:$0xff]
    %v18 = vld [vmem:[%s0 + $0x28] sm:$0xff]
    %v19 = vld [vmem:[%s0 + $0x30] sm:$0xff]
    %v20 = vld [vmem:[%s0 + $0x38] sm:$0xff]
    %v21 = vld [vmem:[%s0 + $0x40] sm:$0xff]
    %v22 = vld [vmem:[%s0 + $0x48] sm:$0xff]
    %v23 = vld [vmem:[%s0 + $0x50] sm:$0xff]
    %v24 = vld [vmem:[%s0 + $0x58] sm:$0xff]
    %v25 = vld [vmem:[%s0 + $0x60] sm:$0xff]
    %v26 = vld [vmem:[%s0 + $0x68] sm:$0xff]
    %v27 = vld [vmem:[%s0 + $0x70] sm:$0xff]
    %v28 = vld [vmem:[%s0 + $0x78] sm:$0xff]
    %v29 = vld [vmem:[%s0 + $0x80] sm:$0xff]
    %v30 = vld [vmem:[%s0 + $0x88] sm:$0xff]
    %v31 = vld [vmem:[%s0 + $0x90] sm:$0xff]
    %v32 = vld [vmem:[%s0 + $0x98] sm:$0xff]
    %v33 = vld [vmem:[%s0 + $0xa0] sm:$0xff]
    %v34 = vld [vmem:[%s0 + $0xa8] sm:$0xff]
    %v35 = vld [vmem:[%s0 + $0xb0] sm:$0xff]
    %v36 = vld [vmem:[%s0 + $0xb8] sm:$0xff]
    %v37 = vld [vmem:[%s0 + $0xc0] sm:$0xff]
    %v38 = vld [vmem:[%s0 + $0xc8] sm:$0xff]
    %v39 = vld [vmem:[%s0 + $0xd0] sm:$0xff]
    %v40 = vld [vmem:[%s0 + $0xd8] sm:$0xff]
    %v41 = vld [vmem:[%s0 + $0xe0] sm:$0xff]
    %v42 = vld [vmem:[%s0 + $0xe8] sm:$0xff]
    %v43 = vld [vmem:[%s0 + $0xf0] sm:$0xff]
    %v44 = vld [vmem:[%s0 + $0xf8] sm:$0xff]
    %v45 = vlaneseq
    %v46 = vand.u32 %v45, 127
    %47 = vset.pattern.permute.xlu0 0
    %48 = vperm.xlu0 %47, %v13
    %v49 = vpop.permute.xlu0 %48
    %50 = vset.pattern.permute.xlu0 0
    %51 = vperm.xlu0 %50, %v14
    %v52 = vpop.permute.xlu0 %51
    %53 = vset.pattern.permute.xlu0 0
    %54 = vperm.xlu0 %53, %v15
    %v55 = vpop.permute.xlu0 %54
    %56 = vset.pattern.permute.xlu0 0
    %57 = vperm.xlu0 %56, %v16
    %v58 = vpop.permute.xlu0 %57
    %59 = vset.pattern.permute.xlu0 0
    %60 = vperm.xlu0 %59, %v17
    %v61 = vpop.permute.xlu0 %60
    %62 = vset.pattern.permute.xlu0 0
    %63 = vperm.xlu0 %62, %v18
    %v64 = vpop.permute.xlu0 %63
    %65 = vset.pattern.permute.xlu0 0
    %66 = vperm.xlu0 %65, %v19
    %v67 = vpop.permute.xlu0 %66
    %68 = vset.pattern.permute.xlu0 0
    %69 = vperm.xlu0 %68, %v20
    %v70 = vpop.permute.xlu0 %69
    %71 = vset.pattern.permute.xlu0 0
    %72 = vperm.xlu0 %71, %v21
    %v73 = vpop.permute.xlu0 %72
    %74 = vset.pattern.permute.xlu0 0
    %75 = vperm.xlu0 %74, %v22
    %v76 = vpop.permute.xlu0 %75
    %77 = vset.pattern.permute.xlu0 0
    %78 = vperm.xlu0 %77, %v23
    %v79 = vpop.permute.xlu0 %78
    %80 = vset.pattern.permute.xlu0 0
    %81 = vperm.xlu0 %80, %v24
    %v82 = vpop.permute.xlu0 %81
    %83 = vset.pattern.permute.xlu0 0
    %84 = vperm.xlu0 %83, %v25
    %v85 = vpop.permute.xlu0 %84
    %86 = vset.pattern.permute.xlu0 0
    %87 = vperm.xlu0 %86, %v26
    %v88 = vpop.permute.xlu0 %87
    %89 = vset.pattern.permute.xlu0 0
    %90 = vperm.xlu0 %89, %v27
    %v91 = vpop.permute.xlu0 %90
    %92 = vset.pattern.permute.xlu0 0
    %93 = vperm.xlu0 %92, %v28
    %v94 = vpop.permute.xlu0 %93
    %95 = vset.pattern.permute.xlu0 0
    %96 = vperm.xlu0 %95, %v29
    %v97 = vpop.permute.xlu0 %96
    %98 = vset.pattern.permute.xlu0 0
    %99 = vperm.xlu0 %98, %v30
    %v100 = vpop.permute.xlu0 %99
    %101 = vset.pattern.permute.xlu0 0
    %102 = vperm.xlu0 %101, %v31
    %v103 = vpop.permute.xlu0 %102
    %104 = vset.pattern.permute.xlu0 0
    %105 = vperm.xlu0 %104, %v32
    %v106 = vpop.permute.xlu0 %105
    %107 = vset.pattern.permute.xlu0 0
    %108 = vperm.xlu0 %107, %v33
    %v109 = vpop.permute.xlu0 %108
    %110 = vset.pattern.permute.xlu0 0
    %111 = vperm.xlu0 %110, %v34
    %v112 = vpop.permute.xlu0 %111
    %113 = vset.pattern.permute.xlu0 0
    %114 = vperm.xlu0 %113, %v35
    %v115 = vpop.permute.xlu0 %114
    %116 = vset.pattern.permute.xlu0 0
    %117 = vperm.xlu0 %116, %v36
    %v118 = vpop.permute.xlu0 %117
    %119 = vset.pattern.permute.xlu0 0
    %120 = vperm.xlu0 %119, %v37
    %v121 = vpop.permute.xlu0 %120
    %122 = vset.pattern.permute.xlu0 0
    %123 = vperm.xlu0 %122, %v38
    %v124 = vpop.permute.xlu0 %123
    %125 = vset.pattern.permute.xlu0 0
    %126 = vperm.xlu0 %125, %v39
    %v127 = vpop.permute.xlu0 %126
    %128 = vset.pattern.permute.xlu0 0
    %129 = vperm.xlu0 %128, %v40
    %v130 = vpop.permute.xlu0 %129
    %131 = vset.pattern.permute.xlu0 0
    %132 = vperm.xlu0 %131, %v41
    %v133 = vpop.permute.xlu0 %132
    %134 = vset.pattern.permute.xlu0 0
    %135 = vperm.xlu0 %134, %v42
    %v136 = vpop.permute.xlu0 %135
    %137 = vset.pattern.permute.xlu0 0
    %138 = vperm.xlu0 %137, %v43
    %v139 = vpop.permute.xlu0 %138
    %140 = vset.pattern.permute.xlu0 0
    %141 = vperm.xlu0 %140, %v44
    %v142 = vpop.permute.xlu0 %141
    %vm143 = vcmp.eq.s32.totalorder %v46, %v49
    %vm144 = vcmp.eq.s32.totalorder %v46, %v52
    %vm145 = vcmp.eq.s32.totalorder %v46, %v55
    %vm146 = vcmp.eq.s32.totalorder %v46, %v58
    %vm147 = vcmp.eq.s32.totalorder %v46, %v61
    %vm148 = vcmp.eq.s32.totalorder %v46, %v64
    %vm149 = vcmp.eq.s32.totalorder %v46, %v67
    %vm150 = vcmp.eq.s32.totalorder %v46, %v70
    %vm151 = vcmp.eq.s32.totalorder %v46, %v73
    %vm152 = vcmp.eq.s32.totalorder %v46, %v76
    %vm153 = vcmp.eq.s32.totalorder %v46, %v79
    %vm154 = vcmp.eq.s32.totalorder %v46, %v82
    %vm155 = vcmp.eq.s32.totalorder %v46, %v85
    %vm156 = vcmp.eq.s32.totalorder %v46, %v88
    %vm157 = vcmp.eq.s32.totalorder %v46, %v91
    %vm158 = vcmp.eq.s32.totalorder %v46, %v94
    %vm159 = vcmp.eq.s32.totalorder %v46, %v97
    %vm160 = vcmp.eq.s32.totalorder %v46, %v100
    %vm161 = vcmp.eq.s32.totalorder %v46, %v103
    %vm162 = vcmp.eq.s32.totalorder %v46, %v106
    %vm163 = vcmp.eq.s32.totalorder %v46, %v109
    %vm164 = vcmp.eq.s32.totalorder %v46, %v112
    %vm165 = vcmp.eq.s32.totalorder %v46, %v115
    %vm166 = vcmp.eq.s32.totalorder %v46, %v118
    %vm167 = vcmp.eq.s32.totalorder %v46, %v121
    %vm168 = vcmp.eq.s32.totalorder %v46, %v124
    %vm169 = vcmp.eq.s32.totalorder %v46, %v127
    %vm170 = vcmp.eq.s32.totalorder %v46, %v130
    %vm171 = vcmp.eq.s32.totalorder %v46, %v133
    %vm172 = vcmp.eq.s32.totalorder %v46, %v136
    %vm173 = vcmp.eq.s32.totalorder %v46, %v139
    %vm174 = vcmp.eq.s32.totalorder %v46, %v142
    %v175 = vsel %vm143, 1, 0
    %v176 = vsel %vm144, 1, 0
    %v177 = vsel %vm145, 1, 0
    %v178 = vsel %vm146, 1, 0
    %v179 = vsel %vm147, 1, 0
    %v180 = vsel %vm148, 1, 0
    %v181 = vsel %vm149, 1, 0
    %v182 = vsel %vm150, 1, 0
    %v183 = vsel %vm151, 1, 0
    %v184 = vsel %vm152, 1, 0
    %v185 = vsel %vm153, 1, 0
    %v186 = vsel %vm154, 1, 0
    %v187 = vsel %vm155, 1, 0
    %v188 = vsel %vm156, 1, 0
    %v189 = vsel %vm157, 1, 0
    %v190 = vsel %vm158, 1, 0
    %v191 = vsel %vm159, 1, 0
    %v192 = vsel %vm160, 1, 0
    %v193 = vsel %vm161, 1, 0
    %v194 = vsel %vm162, 1, 0
    %v195 = vsel %vm163, 1, 0
    %v196 = vsel %vm164, 1, 0
    %v197 = vsel %vm165, 1, 0
    %v198 = vsel %vm166, 1, 0
    %v199 = vsel %vm167, 1, 0
    %v200 = vsel %vm168, 1, 0
    %v201 = vsel %vm169, 1, 0
    %v202 = vsel %vm170, 1, 0
    %v203 = vsel %vm171, 1, 0
    %v204 = vsel %vm172, 1, 0
    %v205 = vsel %vm173, 1, 0
    %v206 = vsel %vm174, 1, 0
    %v207 = vcvt.s32.f32 %v175
    %v208 = vcvt.s32.f32 %v176
    %v209 = vcvt.s32.f32 %v177
    %v210 = vcvt.s32.f32 %v178
    %v211 = vcvt.s32.f32 %v179
    %v212 = vcvt.s32.f32 %v180
    %v213 = vcvt.s32.f32 %v181
    %v214 = vcvt.s32.f32 %v182
    %v215 = vcvt.s32.f32 %v183
    %v216 = vcvt.s32.f32 %v184
    %v217 = vcvt.s32.f32 %v185
    %v218 = vcvt.s32.f32 %v186
    %v219 = vcvt.s32.f32 %v187
    %v220 = vcvt.s32.f32 %v188
    %v221 = vcvt.s32.f32 %v189
    %v222 = vcvt.s32.f32 %v190
    %v223 = vcvt.s32.f32 %v191
    %v224 = vcvt.s32.f32 %v192
    %v225 = vcvt.s32.f32 %v193
    %v226 = vcvt.s32.f32 %v194
    %v227 = vcvt.s32.f32 %v195
    %v228 = vcvt.s32.f32 %v196
    %v229 = vcvt.s32.f32 %v197
    %v230 = vcvt.s32.f32 %v198
    %v231 = vcvt.s32.f32 %v199
    %v232 = vcvt.s32.f32 %v200
    %v233 = vcvt.s32.f32 %v201
    %v234 = vcvt.s32.f32 %v202
    %v235 = vcvt.s32.f32 %v203
    %v236 = vcvt.s32.f32 %v204
    %v237 = vcvt.s32.f32 %v205
    %v238 = vcvt.s32.f32 %v206
    %v239 = vpack.c.bf16 %v208, %v207
    %v240 = vpack.c.bf16 %v210, %v209
    %v241 = vpack.c.bf16 %v212, %v211
    %v242 = vpack.c.bf16 %v214, %v213
    %v243 = vpack.c.bf16 %v216, %v215
    %v244 = vpack.c.bf16 %v218, %v217
    %v245 = vpack.c.bf16 %v220, %v219
    %v246 = vpack.c.bf16 %v222, %v221
    %v247 = vpack.c.bf16 %v224, %v223
    %v248 = vpack.c.bf16 %v226, %v225
    %v249 = vpack.c.bf16 %v228, %v227
    %v250 = vpack.c.bf16 %v230, %v229
    %v251 = vpack.c.bf16 %v232, %v231
    %v252 = vpack.c.bf16 %v234, %v233
    %v253 = vpack.c.bf16 %v236, %v235
    %v254 = vpack.c.bf16 %v238, %v237
    %255 = vset.pattern.permute.xlu0 1
    %256 = vperm.xlu0 %255, %v13
    %v257 = vpop.permute.xlu0 %256
    %258 = vset.pattern.permute.xlu0 1
    %259 = vperm.xlu0 %258, %v14
    %v260 = vpop.permute.xlu0 %259
    %261 = vset.pattern.permute.xlu0 1
    %262 = vperm.xlu0 %261, %v15
    %v263 = vpop.permute.xlu0 %262
    %264 = vset.pattern.permute.xlu0 1
    %265 = vperm.xlu0 %264, %v16
    %v266 = vpop.permute.xlu0 %265
    %267 = vset.pattern.permute.xlu0 1
    %268 = vperm.xlu0 %267, %v17
    %v269 = vpop.permute.xlu0 %268
    %270 = vset.pattern.permute.xlu0 1
    %271 = vperm.xlu0 %270, %v18
    %v272 = vpop.permute.xlu0 %271
    %273 = vset.pattern.permute.xlu0 1
    %274 = vperm.xlu0 %273, %v19
    %v275 = vpop.permute.xlu0 %274
    %276 = vset.pattern.permute.xlu0 1
    %277 = vperm.xlu0 %276, %v20
    %v278 = vpop.permute.xlu0 %277
    %279 = vset.pattern.permute.xlu0 1
    %280 = vperm.xlu0 %279, %v21
    %v281 = vpop.permute.xlu0 %280
    %282 = vset.pattern.permute.xlu0 1
    %283 = vperm.xlu0 %282, %v22
    %v284 = vpop.permute.xlu0 %283
    %285 = vset.pattern.permute.xlu0 1
    %286 = vperm.xlu0 %285, %v23
    %v287 = vpop.permute.xlu0 %286
    %288 = vset.pattern.permute.xlu0 1
    %289 = vperm.xlu0 %288, %v24
    %v290 = vpop.permute.xlu0 %289
    %291 = vset.pattern.permute.xlu0 1
    %292 = vperm.xlu0 %291, %v25
    %v293 = vpop.permute.xlu0 %292
    %294 = vset.pattern.permute.xlu0 1
    %295 = vperm.xlu0 %294, %v26
    %v296 = vpop.permute.xlu0 %295
    %297 = vset.pattern.permute.xlu0 1
    %298 = vperm.xlu0 %297, %v27
    %v299 = vpop.permute.xlu0 %298
    %300 = vset.pattern.permute.xlu0 1
    %301 = vperm.xlu0 %300, %v28
    %v302 = vpop.permute.xlu0 %301
    %303 = vset.pattern.permute.xlu0 1
    %304 = vperm.xlu0 %303, %v29
    %v305 = vpop.permute.xlu0 %304
    %306 = vset.pattern.permute.xlu0 1
    %307 = vperm.xlu0 %306, %v30
    %v308 = vpop.permute.xlu0 %307
    %309 = vset.pattern.permute.xlu0 1
    %310 = vperm.xlu0 %309, %v31
    %v311 = vpop.permute.xlu0 %310
    %312 = vset.pattern.permute.xlu0 1
    %313 = vperm.xlu0 %312, %v32
    %v314 = vpop.permute.xlu0 %313
    %315 = vset.pattern.permute.xlu0 1
    %316 = vperm.xlu0 %315, %v33
    %v317 = vpop.permute.xlu0 %316
    %318 = vset.pattern.permute.xlu0 1
    %319 = vperm.xlu0 %318, %v34
    %v320 = vpop.permute.xlu0 %319
    %321 = vset.pattern.permute.xlu0 1
    %322 = vperm.xlu0 %321, %v35
    %v323 = vpop.permute.xlu0 %322
    %324 = vset.pattern.permute.xlu0 1
    %325 = vperm.xlu0 %324, %v36
    %v326 = vpop.permute.xlu0 %325
    %327 = vset.pattern.permute.xlu0 1
    %328 = vperm.xlu0 %327, %v37
    %v329 = vpop.permute.xlu0 %328
    %330 = vset.pattern.permute.xlu0 1
    %331 = vperm.xlu0 %330, %v38
    %v332 = vpop.permute.xlu0 %331
    %333 = vset.pattern.permute.xlu0 1
    %334 = vperm.xlu0 %333, %v39
    %v335 = vpop.permute.xlu0 %334
    %336 = vset.pattern.permute.xlu0 1
    %337 = vperm.xlu0 %336, %v40
    %v338 = vpop.permute.xlu0 %337
    %339 = vset.pattern.permute.xlu0 1
    %340 = vperm.xlu0 %339, %v41
    %v341 = vpop.permute.xlu0 %340
    %342 = vset.pattern.permute.xlu0 1
    %343 = vperm.xlu0 %342, %v42
    %v344 = vpop.permute.xlu0 %343
    %345 = vset.pattern.permute.xlu0 1
    %346 = vperm.xlu0 %345, %v43
    %v347 = vpop.permute.xlu0 %346
    %348 = vset.pattern.permute.xlu0 1
    %349 = vperm.xlu0 %348, %v44
    %v350 = vpop.permute.xlu0 %349
    %vm351 = vcmp.eq.s32.totalorder %v46, %v257
    %vm352 = vcmp.eq.s32.totalorder %v46, %v260
    %vm353 = vcmp.eq.s32.totalorder %v46, %v263
    %vm354 = vcmp.eq.s32.totalorder %v46, %v266
    %vm355 = vcmp.eq.s32.totalorder %v46, %v269
    %vm356 = vcmp.eq.s32.totalorder %v46, %v272
    %vm357 = vcmp.eq.s32.totalorder %v46, %v275
    %vm358 = vcmp.eq.s32.totalorder %v46, %v278
    %vm359 = vcmp.eq.s32.totalorder %v46, %v281
    %vm360 = vcmp.eq.s32.totalorder %v46, %v284
    %vm361 = vcmp.eq.s32.totalorder %v46, %v287
    %vm362 = vcmp.eq.s32.totalorder %v46, %v290
    %vm363 = vcmp.eq.s32.totalorder %v46, %v293
    %vm364 = vcmp.eq.s32.totalorder %v46, %v296
    %vm365 = vcmp.eq.s32.totalorder %v46, %v299
    %vm366 = vcmp.eq.s32.totalorder %v46, %v302
    %vm367 = vcmp.eq.s32.totalorder %v46, %v305
    %vm368 = vcmp.eq.s32.totalorder %v46, %v308
    %vm369 = vcmp.eq.s32.totalorder %v46, %v311
    %vm370 = vcmp.eq.s32.totalorder %v46, %v314
    %vm371 = vcmp.eq.s32.totalorder %v46, %v317
    %vm372 = vcmp.eq.s32.totalorder %v46, %v320
    %vm373 = vcmp.eq.s32.totalorder %v46, %v323
    %vm374 = vcmp.eq.s32.totalorder %v46, %v326
    %vm375 = vcmp.eq.s32.totalorder %v46, %v329
    %vm376 = vcmp.eq.s32.totalorder %v46, %v332
    %vm377 = vcmp.eq.s32.totalorder %v46, %v335
    %vm378 = vcmp.eq.s32.totalorder %v46, %v338
    %vm379 = vcmp.eq.s32.totalorder %v46, %v341
    %vm380 = vcmp.eq.s32.totalorder %v46, %v344
    %vm381 = vcmp.eq.s32.totalorder %v46, %v347
    %vm382 = vcmp.eq.s32.totalorder %v46, %v350
    %v383 = vsel %vm351, 1, 0
    %v384 = vsel %vm352, 1, 0
    %v385 = vsel %vm353, 1, 0
    %v386 = vsel %vm354, 1, 0
    %v387 = vsel %vm355, 1, 0
    %v388 = vsel %vm356, 1, 0
    %v389 = vsel %vm357, 1, 0
    %v390 = vsel %vm358, 1, 0
    %v391 = vsel %vm359, 1, 0
    %v392 = vsel %vm360, 1, 0
    %v393 = vsel %vm361, 1, 0
    %v394 = vsel %vm362, 1, 0
    %v395 = vsel %vm363, 1, 0
    %v396 = vsel %vm364, 1, 0
    %v397 = vsel %vm365, 1, 0
    %v398 = vsel %vm366, 1, 0
    %v399 = vsel %vm367, 1, 0
    %v400 = vsel %vm368, 1, 0
    %v401 = vsel %vm369, 1, 0
    %v402 = vsel %vm370, 1, 0
    %v403 = vsel %vm371, 1, 0
    %v404 = vsel %vm372, 1, 0
    %v405 = vsel %vm373, 1, 0
    %v406 = vsel %vm374, 1, 0
    %v407 = vsel %vm375, 1, 0
    %v408 = vsel %vm376, 1, 0
    %v409 = vsel %vm377, 1, 0
    %v410 = vsel %vm378, 1, 0
    %v411 = vsel %vm379, 1, 0
    %v412 = vsel %vm380, 1, 0
    %v413 = vsel %vm381, 1, 0
    %v414 = vsel %vm382, 1, 0
    %v415 = vcvt.s32.f32 %v383
    %v416 = vcvt.s32.f32 %v384
    %v417 = vcvt.s32.f32 %v385
    %v418 = vcvt.s32.f32 %v386
    %v419 = vcvt.s32.f32 %v387
    %v420 = vcvt.s32.f32 %v388
    %v421 = vcvt.s32.f32 %v389
    %v422 = vcvt.s32.f32 %v390
    %v423 = vcvt.s32.f32 %v391
    %v424 = vcvt.s32.f32 %v392
    %v425 = vcvt.s32.f32 %v393
    %v426 = vcvt.s32.f32 %v394
    %v427 = vcvt.s32.f32 %v395
    %v428 = vcvt.s32.f32 %v396
    %v429 = vcvt.s32.f32 %v397
    %v430 = vcvt.s32.f32 %v398
    %v431 = vcvt.s32.f32 %v399
    %v432 = vcvt.s32.f32 %v400
    %v433 = vcvt.s32.f32 %v401
    %v434 = vcvt.s32.f32 %v402
    %v435 = vcvt.s32.f32 %v403
    %v436 = vcvt.s32.f32 %v404
    %v437 = vcvt.s32.f32 %v405
    %v438 = vcvt.s32.f32 %v406
    %v439 = vcvt.s32.f32 %v407
    %v440 = vcvt.s32.f32 %v408
    %v441 = vcvt.s32.f32 %v409
    %v442 = vcvt.s32.f32 %v410
    %v443 = vcvt.s32.f32 %v411
    %v444 = vcvt.s32.f32 %v412
    %v445 = vcvt.s32.f32 %v413
    %v446 = vcvt.s32.f32 %v414
    %v447 = vpack.c.bf16 %v416, %v415
    %v448 = vpack.c.bf16 %v418, %v417
    %v449 = vpack.c.bf16 %v420, %v419
    %v450 = vpack.c.bf16 %v422, %v421
    %v451 = vpack.c.bf16 %v424, %v423
    %v452 = vpack.c.bf16 %v426, %v425
    %v453 = vpack.c.bf16 %v428, %v427
    %v454 = vpack.c.bf16 %v430, %v429
    %v455 = vpack.c.bf16 %v432, %v431
    %v456 = vpack.c.bf16 %v434, %v433
    %v457 = vpack.c.bf16 %v436, %v435
    %v458 = vpack.c.bf16 %v438, %v437
    %v459 = vpack.c.bf16 %v440, %v439
    %v460 = vpack.c.bf16 %v442, %v441
    %v461 = vpack.c.bf16 %v444, %v443
    %v462 = vpack.c.bf16 %v446, %v445
    %v463 = vadd.bf16 %v239, %v447
    %v464 = vadd.bf16 %v240, %v448
    %v465 = vadd.bf16 %v241, %v449
    %v466 = vadd.bf16 %v242, %v450
    %v467 = vadd.bf16 %v243, %v451
    %v468 = vadd.bf16 %v244, %v452
    %v469 = vadd.bf16 %v245, %v453
    %v470 = vadd.bf16 %v246, %v454
    %v471 = vadd.bf16 %v247, %v455
    %v472 = vadd.bf16 %v248, %v456
    %v473 = vadd.bf16 %v249, %v457
    %v474 = vadd.bf16 %v250, %v458
    %v475 = vadd.bf16 %v251, %v459
    %v476 = vadd.bf16 %v252, %v460
    %v477 = vadd.bf16 %v253, %v461
    %v478 = vadd.bf16 %v254, %v462
    %479 = vset.pattern.permute.xlu0 2
    %480 = vperm.xlu0 %479, %v13
    %v481 = vpop.permute.xlu0 %480
    %482 = vset.pattern.permute.xlu0 2
    %483 = vperm.xlu0 %482, %v14
    %v484 = vpop.permute.xlu0 %483
    %485 = vset.pattern.permute.xlu0 2
    %486 = vperm.xlu0 %485, %v15
    %v487 = vpop.permute.xlu0 %486
    %488 = vset.pattern.permute.xlu0 2
    %489 = vperm.xlu0 %488, %v16
    %v490 = vpop.permute.xlu0 %489
    %491 = vset.pattern.permute.xlu0 2
    %492 = vperm.xlu0 %491, %v17
    %v493 = vpop.permute.xlu0 %492
    %494 = vset.pattern.permute.xlu0 2
    %495 = vperm.xlu0 %494, %v18
    %v496 = vpop.permute.xlu0 %495
    %497 = vset.pattern.permute.xlu0 2
    %498 = vperm.xlu0 %497, %v19
    %v499 = vpop.permute.xlu0 %498
    %500 = vset.pattern.permute.xlu0 2
    %501 = vperm.xlu0 %500, %v20
    %v502 = vpop.permute.xlu0 %501
    %503 = vset.pattern.permute.xlu0 2
    %504 = vperm.xlu0 %503, %v21
    %v505 = vpop.permute.xlu0 %504
    %506 = vset.pattern.permute.xlu0 2
    %507 = vperm.xlu0 %506, %v22
    %v508 = vpop.permute.xlu0 %507
    %509 = vset.pattern.permute.xlu0 2
    %510 = vperm.xlu0 %509, %v23
    %v511 = vpop.permute.xlu0 %510
    %512 = vset.pattern.permute.xlu0 2
    %513 = vperm.xlu0 %512, %v24
    %v514 = vpop.permute.xlu0 %513
    %515 = vset.pattern.permute.xlu0 2
    %516 = vperm.xlu0 %515, %v25
    %v517 = vpop.permute.xlu0 %516
    %518 = vset.pattern.permute.xlu0 2
    %519 = vperm.xlu0 %518, %v26
    %v520 = vpop.permute.xlu0 %519
    %521 = vset.pattern.permute.xlu0 2
    %522 = vperm.xlu0 %521, %v27
    %v523 = vpop.permute.xlu0 %522
    %524 = vset.pattern.permute.xlu0 2
    %525 = vperm.xlu0 %524, %v28
    %v526 = vpop.permute.xlu0 %525
    %527 = vset.pattern.permute.xlu0 2
    %528 = vperm.xlu0 %527, %v29
    %v529 = vpop.permute.xlu0 %528
    %530 = vset.pattern.permute.xlu0 2
    %531 = vperm.xlu0 %530, %v30
    %v532 = vpop.permute.xlu0 %531
    %533 = vset.pattern.permute.xlu0 2
    %534 = vperm.xlu0 %533, %v31
    %v535 = vpop.permute.xlu0 %534
    %536 = vset.pattern.permute.xlu0 2
    %537 = vperm.xlu0 %536, %v32
    %v538 = vpop.permute.xlu0 %537
    %539 = vset.pattern.permute.xlu0 2
    %540 = vperm.xlu0 %539, %v33
    %v541 = vpop.permute.xlu0 %540
    %542 = vset.pattern.permute.xlu0 2
    %543 = vperm.xlu0 %542, %v34
    %v544 = vpop.permute.xlu0 %543
    %545 = vset.pattern.permute.xlu0 2
    %546 = vperm.xlu0 %545, %v35
    %v547 = vpop.permute.xlu0 %546
    %548 = vset.pattern.permute.xlu0 2
    %549 = vperm.xlu0 %548, %v36
    %v550 = vpop.permute.xlu0 %549
    %551 = vset.pattern.permute.xlu0 2
    %552 = vperm.xlu0 %551, %v37
    %v553 = vpop.permute.xlu0 %552
    %554 = vset.pattern.permute.xlu0 2
    %555 = vperm.xlu0 %554, %v38
    %v556 = vpop.permute.xlu0 %555
    %557 = vset.pattern.permute.xlu0 2
    %558 = vperm.xlu0 %557, %v39
    %v559 = vpop.permute.xlu0 %558
    %560 = vset.pattern.permute.xlu0 2
    %561 = vperm.xlu0 %560, %v40
    %v562 = vpop.permute.xlu0 %561
    %563 = vset.pattern.permute.xlu0 2
    %564 = vperm.xlu0 %563, %v41
    %v565 = vpop.permute.xlu0 %564
    %566 = vset.pattern.permute.xlu0 2
    %567 = vperm.xlu0 %566, %v42
    %v568 = vpop.permute.xlu0 %567
    %569 = vset.pattern.permute.xlu0 2
    %570 = vperm.xlu0 %569, %v43
    %v571 = vpop.permute.xlu0 %570
    %572 = vset.pattern.permute.xlu0 2
    %573 = vperm.xlu0 %572, %v44
    %v574 = vpop.permute.xlu0 %573
    %vm575 = vcmp.eq.s32.totalorder %v46, %v481
    %vm576 = vcmp.eq.s32.totalorder %v46, %v484
    %vm577 = vcmp.eq.s32.totalorder %v46, %v487
    %vm578 = vcmp.eq.s32.totalorder %v46, %v490
    %vm579 = vcmp.eq.s32.totalorder %v46, %v493
    %vm580 = vcmp.eq.s32.totalorder %v46, %v496
    %vm581 = vcmp.eq.s32.totalorder %v46, %v499
    %vm582 = vcmp.eq.s32.totalorder %v46, %v502
    %vm583 = vcmp.eq.s32.totalorder %v46, %v505
    %vm584 = vcmp.eq.s32.totalorder %v46, %v508
    %vm585 = vcmp.eq.s32.totalorder %v46, %v511
    %vm586 = vcmp.eq.s32.totalorder %v46, %v514
    %vm587 = vcmp.eq.s32.totalorder %v46, %v517
    %vm588 = vcmp.eq.s32.totalorder %v46, %v520
    %vm589 = vcmp.eq.s32.totalorder %v46, %v523
    %vm590 = vcmp.eq.s32.totalorder %v46, %v526
    %vm591 = vcmp.eq.s32.totalorder %v46, %v529
    %vm592 = vcmp.eq.s32.totalorder %v46, %v532
    %vm593 = vcmp.eq.s32.totalorder %v46, %v535
    %vm594 = vcmp.eq.s32.totalorder %v46, %v538
    %vm595 = vcmp.eq.s32.totalorder %v46, %v541
    %vm596 = vcmp.eq.s32.totalorder %v46, %v544
    %vm597 = vcmp.eq.s32.totalorder %v46, %v547
    %vm598 = vcmp.eq.s32.totalorder %v46, %v550
    %vm599 = vcmp.eq.s32.totalorder %v46, %v553
    %vm600 = vcmp.eq.s32.totalorder %v46, %v556
    %vm601 = vcmp.eq.s32.totalorder %v46, %v559
    %vm602 = vcmp.eq.s32.totalorder %v46, %v562
    %vm603 = vcmp.eq.s32.totalorder %v46, %v565
    %vm604 = vcmp.eq.s32.totalorder %v46, %v568
    %vm605 = vcmp.eq.s32.totalorder %v46, %v571
    %vm606 = vcmp.eq.s32.totalorder %v46, %v574
    %v607 = vsel %vm575, 1, 0
    %v608 = vsel %vm576, 1, 0
    %v609 = vsel %vm577, 1, 0
    %v610 = vsel %vm578, 1, 0
    %v611 = vsel %vm579, 1, 0
    %v612 = vsel %vm580, 1, 0
    %v613 = vsel %vm581, 1, 0
    %v614 = vsel %vm582, 1, 0
    %v615 = vsel %vm583, 1, 0
    %v616 = vsel %vm584, 1, 0
    %v617 = vsel %vm585, 1, 0
    %v618 = vsel %vm586, 1, 0
    %v619 = vsel %vm587, 1, 0
    %v620 = vsel %vm588, 1, 0
    %v621 = vsel %vm589, 1, 0
    %v622 = vsel %vm590, 1, 0
    %v623 = vsel %vm591, 1, 0
    %v624 = vsel %vm592, 1, 0
    %v625 = vsel %vm593, 1, 0
    %v626 = vsel %vm594, 1, 0
    %v627 = vsel %vm595, 1, 0
    %v628 = vsel %vm596, 1, 0
    %v629 = vsel %vm597, 1, 0
    %v630 = vsel %vm598, 1, 0
    %v631 = vsel %vm599, 1, 0
    %v632 = vsel %vm600, 1, 0
    %v633 = vsel %vm601, 1, 0
    %v634 = vsel %vm602, 1, 0
    %v635 = vsel %vm603, 1, 0
    %v636 = vsel %vm604, 1, 0
    %v637 = vsel %vm605, 1, 0
    %v638 = vsel %vm606, 1, 0
    %v639 = vcvt.s32.f32 %v607
    %v640 = vcvt.s32.f32 %v608
    %v641 = vcvt.s32.f32 %v609
    %v642 = vcvt.s32.f32 %v610
    %v643 = vcvt.s32.f32 %v611
    %v644 = vcvt.s32.f32 %v612
    %v645 = vcvt.s32.f32 %v613
    %v646 = vcvt.s32.f32 %v614
    %v647 = vcvt.s32.f32 %v615
    %v648 = vcvt.s32.f32 %v616
    %v649 = vcvt.s32.f32 %v617
    %v650 = vcvt.s32.f32 %v618
    %v651 = vcvt.s32.f32 %v619
    %v652 = vcvt.s32.f32 %v620
    %v653 = vcvt.s32.f32 %v621
    %v654 = vcvt.s32.f32 %v622
    %v655 = vcvt.s32.f32 %v623
    %v656 = vcvt.s32.f32 %v624
    %v657 = vcvt.s32.f32 %v625
    %v658 = vcvt.s32.f32 %v626
    %v659 = vcvt.s32.f32 %v627
    %v660 = vcvt.s32.f32 %v628
    %v661 = vcvt.s32.f32 %v629
    %v662 = vcvt.s32.f32 %v630
    %v663 = vcvt.s32.f32 %v631
    %v664 = vcvt.s32.f32 %v632
    %v665 = vcvt.s32.f32 %v633
    %v666 = vcvt.s32.f32 %v634
    %v667 = vcvt.s32.f32 %v635
    %v668 = vcvt.s32.f32 %v636
    %v669 = vcvt.s32.f32 %v637
    %v670 = vcvt.s32.f32 %v638
    %v671 = vpack.c.bf16 %v640, %v639
    %v672 = vpack.c.bf16 %v642, %v641
    %v673 = vpack.c.bf16 %v644, %v643
    %v674 = vpack.c.bf16 %v646, %v645
    %v675 = vpack.c.bf16 %v648, %v647
    %v676 = vpack.c.bf16 %v650, %v649
    %v677 = vpack.c.bf16 %v652, %v651
    %v678 = vpack.c.bf16 %v654, %v653
    %v679 = vpack.c.bf16 %v656, %v655
    %v680 = vpack.c.bf16 %v658, %v657
    %v681 = vpack.c.bf16 %v660, %v659
    %v682 = vpack.c.bf16 %v662, %v661
    %v683 = vpack.c.bf16 %v664, %v663
    %v684 = vpack.c.bf16 %v666, %v665
    %v685 = vpack.c.bf16 %v668, %v667
    %v686 = vpack.c.bf16 %v670, %v669
    %v687 = vadd.bf16 %v463, %v671
    %v688 = vadd.bf16 %v464, %v672
    %v689 = vadd.bf16 %v465, %v673
    %v690 = vadd.bf16 %v466, %v674
    %v691 = vadd.bf16 %v467, %v675
    %v692 = vadd.bf16 %v468, %v676
    %v693 = vadd.bf16 %v469, %v677
    %v694 = vadd.bf16 %v470, %v678
    %v695 = vadd.bf16 %v471, %v679
    %v696 = vadd.bf16 %v472, %v680
    %v697 = vadd.bf16 %v473, %v681
    %v698 = vadd.bf16 %v474, %v682
    %v699 = vadd.bf16 %v475, %v683
    %v700 = vadd.bf16 %v476, %v684
    %v701 = vadd.bf16 %v477, %v685
    %v702 = vadd.bf16 %v478, %v686
    %703 = vset.pattern.permute.xlu0 3
    %704 = vperm.xlu0 %703, %v13
    %v705 = vpop.permute.xlu0 %704
    %706 = vset.pattern.permute.xlu0 3
    %707 = vperm.xlu0 %706, %v14
    %v708 = vpop.permute.xlu0 %707
    %709 = vset.pattern.permute.xlu0 3
    %710 = vperm.xlu0 %709, %v15
    %v711 = vpop.permute.xlu0 %710
    %712 = vset.pattern.permute.xlu0 3
    %713 = vperm.xlu0 %712, %v16
    %v714 = vpop.permute.xlu0 %713
    %715 = vset.pattern.permute.xlu0 3
    %716 = vperm.xlu0 %715, %v17
    %v717 = vpop.permute.xlu0 %716
    %718 = vset.pattern.permute.xlu0 3
    %719 = vperm.xlu0 %718, %v18
    %v720 = vpop.permute.xlu0 %719
    %721 = vset.pattern.permute.xlu0 3
    %722 = vperm.xlu0 %721, %v19
    %v723 = vpop.permute.xlu0 %722
    %724 = vset.pattern.permute.xlu0 3
    %725 = vperm.xlu0 %724, %v20
    %v726 = vpop.permute.xlu0 %725
    %727 = vset.pattern.permute.xlu0 3
    %728 = vperm.xlu0 %727, %v21
    %v729 = vpop.permute.xlu0 %728
    %730 = vset.pattern.permute.xlu0 3
    %731 = vperm.xlu0 %730, %v22
    %v732 = vpop.permute.xlu0 %731
    %733 = vset.pattern.permute.xlu0 3
    %734 = vperm.xlu0 %733, %v23
    %v735 = vpop.permute.xlu0 %734
    %736 = vset.pattern.permute.xlu0 3
    %737 = vperm.xlu0 %736, %v24
    %v738 = vpop.permute.xlu0 %737
    %739 = vset.pattern.permute.xlu0 3
    %740 = vperm.xlu0 %739, %v25
    %v741 = vpop.permute.xlu0 %740
    %742 = vset.pattern.permute.xlu0 3
    %743 = vperm.xlu0 %742, %v26
    %v744 = vpop.permute.xlu0 %743
    %745 = vset.pattern.permute.xlu0 3
    %746 = vperm.xlu0 %745, %v27
    %v747 = vpop.permute.xlu0 %746
    %748 = vset.pattern.permute.xlu0 3
    %749 = vperm.xlu0 %748, %v28
    %v750 = vpop.permute.xlu0 %749
    %751 = vset.pattern.permute.xlu0 3
    %752 = vperm.xlu0 %751, %v29
    %v753 = vpop.permute.xlu0 %752
    %754 = vset.pattern.permute.xlu0 3
    %755 = vperm.xlu0 %754, %v30
    %v756 = vpop.permute.xlu0 %755
    %757 = vset.pattern.permute.xlu0 3
    %758 = vperm.xlu0 %757, %v31
    %v759 = vpop.permute.xlu0 %758
    %760 = vset.pattern.permute.xlu0 3
    %761 = vperm.xlu0 %760, %v32
    %v762 = vpop.permute.xlu0 %761
    %763 = vset.pattern.permute.xlu0 3
    %764 = vperm.xlu0 %763, %v33
    %v765 = vpop.permute.xlu0 %764
    %766 = vset.pattern.permute.xlu0 3
    %767 = vperm.xlu0 %766, %v34
    %v768 = vpop.permute.xlu0 %767
    %769 = vset.pattern.permute.xlu0 3
    %770 = vperm.xlu0 %769, %v35
    %v771 = vpop.permute.xlu0 %770
    %772 = vset.pattern.permute.xlu0 3
    %773 = vperm.xlu0 %772, %v36
    %v774 = vpop.permute.xlu0 %773
    %775 = vset.pattern.permute.xlu0 3
    %776 = vperm.xlu0 %775, %v37
    %v777 = vpop.permute.xlu0 %776
    %778 = vset.pattern.permute.xlu0 3
    %779 = vperm.xlu0 %778, %v38
    %v780 = vpop.permute.xlu0 %779
    %781 = vset.pattern.permute.xlu0 3
    %782 = vperm.xlu0 %781, %v39
    %v783 = vpop.permute.xlu0 %782
    %784 = vset.pattern.permute.xlu0 3
    %785 = vperm.xlu0 %784, %v40
    %v786 = vpop.permute.xlu0 %785
    %787 = vset.pattern.permute.xlu0 3
    %788 = vperm.xlu0 %787, %v41
    %v789 = vpop.permute.xlu0 %788
    %790 = vset.pattern.permute.xlu0 3
    %791 = vperm.xlu0 %790, %v42
    %v792 = vpop.permute.xlu0 %791
    %793 = vset.pattern.permute.xlu0 3
    %794 = vperm.xlu0 %793, %v43
    %v795 = vpop.permute.xlu0 %794
    %796 = vset.pattern.permute.xlu0 3
    %797 = vperm.xlu0 %796, %v44
    %v798 = vpop.permute.xlu0 %797
    %vm799 = vcmp.eq.s32.totalorder %v46, %v705
    %vm800 = vcmp.eq.s32.totalorder %v46, %v708
    %vm801 = vcmp.eq.s32.totalorder %v46, %v711
    %vm802 = vcmp.eq.s32.totalorder %v46, %v714
    %vm803 = vcmp.eq.s32.totalorder %v46, %v717
    %vm804 = vcmp.eq.s32.totalorder %v46, %v720
    %vm805 = vcmp.eq.s32.totalorder %v46, %v723
    %vm806 = vcmp.eq.s32.totalorder %v46, %v726
    %vm807 = vcmp.eq.s32.totalorder %v46, %v729
    %vm808 = vcmp.eq.s32.totalorder %v46, %v732
    %vm809 = vcmp.eq.s32.totalorder %v46, %v735
    %vm810 = vcmp.eq.s32.totalorder %v46, %v738
    %vm811 = vcmp.eq.s32.totalorder %v46, %v741
    %vm812 = vcmp.eq.s32.totalorder %v46, %v744
    %vm813 = vcmp.eq.s32.totalorder %v46, %v747
    %vm814 = vcmp.eq.s32.totalorder %v46, %v750
    %vm815 = vcmp.eq.s32.totalorder %v46, %v753
    %vm816 = vcmp.eq.s32.totalorder %v46, %v756
    %vm817 = vcmp.eq.s32.totalorder %v46, %v759
    %vm818 = vcmp.eq.s32.totalorder %v46, %v762
    %vm819 = vcmp.eq.s32.totalorder %v46, %v765
    %vm820 = vcmp.eq.s32.totalorder %v46, %v768
    %vm821 = vcmp.eq.s32.totalorder %v46, %v771
    %vm822 = vcmp.eq.s32.totalorder %v46, %v774
    %vm823 = vcmp.eq.s32.totalorder %v46, %v777
    %vm824 = vcmp.eq.s32.totalorder %v46, %v780
    %vm825 = vcmp.eq.s32.totalorder %v46, %v783
    %vm826 = vcmp.eq.s32.totalorder %v46, %v786
    %vm827 = vcmp.eq.s32.totalorder %v46, %v789
    %vm828 = vcmp.eq.s32.totalorder %v46, %v792
    %vm829 = vcmp.eq.s32.totalorder %v46, %v795
    %vm830 = vcmp.eq.s32.totalorder %v46, %v798
    %v831 = vsel %vm799, 1, 0
    %v832 = vsel %vm800, 1, 0
    %v833 = vsel %vm801, 1, 0
    %v834 = vsel %vm802, 1, 0
    %v835 = vsel %vm803, 1, 0
    %v836 = vsel %vm804, 1, 0
    %v837 = vsel %vm805, 1, 0
    %v838 = vsel %vm806, 1, 0
    %v839 = vsel %vm807, 1, 0
    %v840 = vsel %vm808, 1, 0
    %v841 = vsel %vm809, 1, 0
    %v842 = vsel %vm810, 1, 0
    %v843 = vsel %vm811, 1, 0
    %v844 = vsel %vm812, 1, 0
    %v845 = vsel %vm813, 1, 0
    %v846 = vsel %vm814, 1, 0
    %v847 = vsel %vm815, 1, 0
    %v848 = vsel %vm816, 1, 0
    %v849 = vsel %vm817, 1, 0
    %v850 = vsel %vm818, 1, 0
    %v851 = vsel %vm819, 1, 0
    %v852 = vsel %vm820, 1, 0
    %v853 = vsel %vm821, 1, 0
    %v854 = vsel %vm822, 1, 0
    %v855 = vsel %vm823, 1, 0
    %v856 = vsel %vm824, 1, 0
    %v857 = vsel %vm825, 1, 0
    %v858 = vsel %vm826, 1, 0
    %v859 = vsel %vm827, 1, 0
    %v860 = vsel %vm828, 1, 0
    %v861 = vsel %vm829, 1, 0
    %v862 = vsel %vm830, 1, 0
    %v863 = vcvt.s32.f32 %v831
    %v864 = vcvt.s32.f32 %v832
    %v865 = vcvt.s32.f32 %v833
    %v866 = vcvt.s32.f32 %v834
    %v867 = vcvt.s32.f32 %v835
    %v868 = vcvt.s32.f32 %v836
    %v869 = vcvt.s32.f32 %v837
    %v870 = vcvt.s32.f32 %v838
    %v871 = vcvt.s32.f32 %v839
    %v872 = vcvt.s32.f32 %v840
    %v873 = vcvt.s32.f32 %v841
    %v874 = vcvt.s32.f32 %v842
    %v875 = vcvt.s32.f32 %v843
    %v876 = vcvt.s32.f32 %v844
    %v877 = vcvt.s32.f32 %v845
    %v878 = vcvt.s32.f32 %v846
    %v879 = vcvt.s32.f32 %v847
    %v880 = vcvt.s32.f32 %v848
    %v881 = vcvt.s32.f32 %v849
    %v882 = vcvt.s32.f32 %v850
    %v883 = vcvt.s32.f32 %v851
    %v884 = vcvt.s32.f32 %v852
    %v885 = vcvt.s32.f32 %v853
    %v886 = vcvt.s32.f32 %v854
    %v887 = vcvt.s32.f32 %v855
    %v888 = vcvt.s32.f32 %v856
    %v889 = vcvt.s32.f32 %v857
    %v890 = vcvt.s32.f32 %v858
    %v891 = vcvt.s32.f32 %v859
    %v892 = vcvt.s32.f32 %v860
    %v893 = vcvt.s32.f32 %v861
    %v894 = vcvt.s32.f32 %v862
    %v895 = vpack.c.bf16 %v864, %v863
    %v896 = vpack.c.bf16 %v866, %v865
    %v897 = vpack.c.bf16 %v868, %v867
    %v898 = vpack.c.bf16 %v870, %v869
    %v899 = vpack.c.bf16 %v872, %v871
    %v900 = vpack.c.bf16 %v874, %v873
    %v901 = vpack.c.bf16 %v876, %v875
    %v902 = vpack.c.bf16 %v878, %v877
    %v903 = vpack.c.bf16 %v880, %v879
    %v904 = vpack.c.bf16 %v882, %v881
    %v905 = vpack.c.bf16 %v884, %v883
    %v906 = vpack.c.bf16 %v886, %v885
    %v907 = vpack.c.bf16 %v888, %v887
    %v908 = vpack.c.bf16 %v890, %v889
    %v909 = vpack.c.bf16 %v892, %v891
    %v910 = vpack.c.bf16 %v894, %v893
    %v911 = vadd.bf16 %v687, %v895
    %v912 = vadd.bf16 %v688, %v896
    %v913 = vadd.bf16 %v689, %v897
    %v914 = vadd.bf16 %v690, %v898
    %v915 = vadd.bf16 %v691, %v899
    %v916 = vadd.bf16 %v692, %v900
    %v917 = vadd.bf16 %v693, %v901
    %v918 = vadd.bf16 %v694, %v902
    %v919 = vadd.bf16 %v695, %v903
    %v920 = vadd.bf16 %v696, %v904
    %v921 = vadd.bf16 %v697, %v905
    %v922 = vadd.bf16 %v698, %v906
    %v923 = vadd.bf16 %v699, %v907
    %v924 = vadd.bf16 %v700, %v908
    %v925 = vadd.bf16 %v701, %v909
    %v926 = vadd.bf16 %v702, %v910
    %927 = vset.pattern.permute.xlu0 4
    %928 = vperm.xlu0 %927, %v13
    %v929 = vpop.permute.xlu0 %928
    %930 = vset.pattern.permute.xlu0 4
    %931 = vperm.xlu0 %930, %v14
    %v932 = vpop.permute.xlu0 %931
    %933 = vset.pattern.permute.xlu0 4
    %934 = vperm.xlu0 %933, %v15
    %v935 = vpop.permute.xlu0 %934
    %936 = vset.pattern.permute.xlu0 4
    %937 = vperm.xlu0 %936, %v16
    %v938 = vpop.permute.xlu0 %937
    %939 = vset.pattern.permute.xlu0 4
    %940 = vperm.xlu0 %939, %v17
    %v941 = vpop.permute.xlu0 %940
    %942 = vset.pattern.permute.xlu0 4
    %943 = vperm.xlu0 %942, %v18
    %v944 = vpop.permute.xlu0 %943
    %945 = vset.pattern.permute.xlu0 4
    %946 = vperm.xlu0 %945, %v19
    %v947 = vpop.permute.xlu0 %946
    %948 = vset.pattern.permute.xlu0 4
    %949 = vperm.xlu0 %948, %v20
    %v950 = vpop.permute.xlu0 %949
    %951 = vset.pattern.permute.xlu0 4
    %952 = vperm.xlu0 %951, %v21
    %v953 = vpop.permute.xlu0 %952
    %954 = vset.pattern.permute.xlu0 4
    %955 = vperm.xlu0 %954, %v22
    %v956 = vpop.permute.xlu0 %955
    %957 = vset.pattern.permute.xlu0 4
    %958 = vperm.xlu0 %957, %v23
    %v959 = vpop.permute.xlu0 %958
    %960 = vset.pattern.permute.xlu0 4
    %961 = vperm.xlu0 %960, %v24
    %v962 = vpop.permute.xlu0 %961
    %963 = vset.pattern.permute.xlu0 4
    %964 = vperm.xlu0 %963, %v25
    %v965 = vpop.permute.xlu0 %964
    %966 = vset.pattern.permute.xlu0 4
    %967 = vperm.xlu0 %966, %v26
    %v968 = vpop.permute.xlu0 %967
    %969 = vset.pattern.permute.xlu0 4
    %970 = vperm.xlu0 %969, %v27
    %v971 = vpop.permute.xlu0 %970
    %972 = vset.pattern.permute.xlu0 4
    %973 = vperm.xlu0 %972, %v28
    %v974 = vpop.permute.xlu0 %973
    %975 = vset.pattern.permute.xlu0 4
    %976 = vperm.xlu0 %975, %v29
    %v977 = vpop.permute.xlu0 %976
    %978 = vset.pattern.permute.xlu0 4
    %979 = vperm.xlu0 %978, %v30
    %v980 = vpop.permute.xlu0 %979
    %981 = vset.pattern.permute.xlu0 4
    %982 = vperm.xlu0 %981, %v31
    %v983 = vpop.permute.xlu0 %982
    %984 = vset.pattern.permute.xlu0 4
    %985 = vperm.xlu0 %984, %v32
    %v986 = vpop.permute.xlu0 %985
    %987 = vset.pattern.permute.xlu0 4
    %988 = vperm.xlu0 %987, %v33
    %v989 = vpop.permute.xlu0 %988
    %990 = vset.pattern.permute.xlu0 4
    %991 = vperm.xlu0 %990, %v34
    %v992 = vpop.permute.xlu0 %991
    %993 = vset.pattern.permute.xlu0 4
    %994 = vperm.xlu0 %993, %v35
    %v995 = vpop.permute.xlu0 %994
    %996 = vset.pattern.permute.xlu0 4
    %997 = vperm.xlu0 %996, %v36
    %v998 = vpop.permute.xlu0 %997
    %999 = vset.pattern.permute.xlu0 4
    %1000 = vperm.xlu0 %999, %v37
    %v1001 = vpop.permute.xlu0 %1000
    %1002 = vset.pattern.permute.xlu0 4
    %1003 = vperm.xlu0 %1002, %v38
    %v1004 = vpop.permute.xlu0 %1003
    %1005 = vset.pattern.permute.xlu0 4
    %1006 = vperm.xlu0 %1005, %v39
    %v1007 = vpop.permute.xlu0 %1006
    %1008 = vset.pattern.permute.xlu0 4
    %1009 = vperm.xlu0 %1008, %v40
    %v1010 = vpop.permute.xlu0 %1009
    %1011 = vset.pattern.permute.xlu0 4
    %1012 = vperm.xlu0 %1011, %v41
    %v1013 = vpop.permute.xlu0 %1012
    %1014 = vset.pattern.permute.xlu0 4
    %1015 = vperm.xlu0 %1014, %v42
    %v1016 = vpop.permute.xlu0 %1015
    %1017 = vset.pattern.permute.xlu0 4
    %1018 = vperm.xlu0 %1017, %v43
    %v1019 = vpop.permute.xlu0 %1018
    %1020 = vset.pattern.permute.xlu0 4
    %1021 = vperm.xlu0 %1020, %v44
    %v1022 = vpop.permute.xlu0 %1021
    %vm1023 = vcmp.eq.s32.totalorder %v46, %v929
    %vm1024 = vcmp.eq.s32.totalorder %v46, %v932
    %vm1025 = vcmp.eq.s32.totalorder %v46, %v935
    %vm1026 = vcmp.eq.s32.totalorder %v46, %v938
    %vm1027 = vcmp.eq.s32.totalorder %v46, %v941
    %vm1028 = vcmp.eq.s32.totalorder %v46, %v944
    %vm1029 = vcmp.eq.s32.totalorder %v46, %v947
    %vm1030 = vcmp.eq.s32.totalorder %v46, %v950
    %vm1031 = vcmp.eq.s32.totalorder %v46, %v953
    %vm1032 = vcmp.eq.s32.totalorder %v46, %v956
    %vm1033 = vcmp.eq.s32.totalorder %v46, %v959
    %vm1034 = vcmp.eq.s32.totalorder %v46, %v962
    %vm1035 = vcmp.eq.s32.totalorder %v46, %v965
    %vm1036 = vcmp.eq.s32.totalorder %v46, %v968
    %vm1037 = vcmp.eq.s32.totalorder %v46, %v971
    %vm1038 = vcmp.eq.s32.totalorder %v46, %v974
    %vm1039 = vcmp.eq.s32.totalorder %v46, %v977
    %vm1040 = vcmp.eq.s32.totalorder %v46, %v980
    %vm1041 = vcmp.eq.s32.totalorder %v46, %v983
    %vm1042 = vcmp.eq.s32.totalorder %v46, %v986
    %vm1043 = vcmp.eq.s32.totalorder %v46, %v989
    %vm1044 = vcmp.eq.s32.totalorder %v46, %v992
    %vm1045 = vcmp.eq.s32.totalorder %v46, %v995
    %vm1046 = vcmp.eq.s32.totalorder %v46, %v998
    %vm1047 = vcmp.eq.s32.totalorder %v46, %v1001
    %vm1048 = vcmp.eq.s32.totalorder %v46, %v1004
    %vm1049 = vcmp.eq.s32.totalorder %v46, %v1007
    %vm1050 = vcmp.eq.s32.totalorder %v46, %v1010
    %vm1051 = vcmp.eq.s32.totalorder %v46, %v1013
    %vm1052 = vcmp.eq.s32.totalorder %v46, %v1016
    %vm1053 = vcmp.eq.s32.totalorder %v46, %v1019
    %vm1054 = vcmp.eq.s32.totalorder %v46, %v1022
    %v1055 = vsel %vm1023, 1, 0
    %v1056 = vsel %vm1024, 1, 0
    %v1057 = vsel %vm1025, 1, 0
    %v1058 = vsel %vm1026, 1, 0
    %v1059 = vsel %vm1027, 1, 0
    %v1060 = vsel %vm1028, 1, 0
    %v1061 = vsel %vm1029, 1, 0
    %v1062 = vsel %vm1030, 1, 0
    %v1063 = vsel %vm1031, 1, 0
    %v1064 = vsel %vm1032, 1, 0
    %v1065 = vsel %vm1033, 1, 0
    %v1066 = vsel %vm1034, 1, 0
    %v1067 = vsel %vm1035, 1, 0
    %v1068 = vsel %vm1036, 1, 0
    %v1069 = vsel %vm1037, 1, 0
    %v1070 = vsel %vm1038, 1, 0
    %v1071 = vsel %vm1039, 1, 0
    %v1072 = vsel %vm1040, 1, 0
    %v1073 = vsel %vm1041, 1, 0
    %v1074 = vsel %vm1042, 1, 0
    %v1075 = vsel %vm1043, 1, 0
    %v1076 = vsel %vm1044, 1, 0
    %v1077 = vsel %vm1045, 1, 0
    %v1078 = vsel %vm1046, 1, 0
    %v1079 = vsel %vm1047, 1, 0
    %v1080 = vsel %vm1048, 1, 0
    %v1081 = vsel %vm1049, 1, 0
    %v1082 = vsel %vm1050, 1, 0
    %v1083 = vsel %vm1051, 1, 0
    %v1084 = vsel %vm1052, 1, 0
    %v1085 = vsel %vm1053, 1, 0
    %v1086 = vsel %vm1054, 1, 0
    %v1087 = vcvt.s32.f32 %v1055
    %v1088 = vcvt.s32.f32 %v1056
    %v1089 = vcvt.s32.f32 %v1057
    %v1090 = vcvt.s32.f32 %v1058
    %v1091 = vcvt.s32.f32 %v1059
    %v1092 = vcvt.s32.f32 %v1060
    %v1093 = vcvt.s32.f32 %v1061
    %v1094 = vcvt.s32.f32 %v1062
    %v1095 = vcvt.s32.f32 %v1063
    %v1096 = vcvt.s32.f32 %v1064
    %v1097 = vcvt.s32.f32 %v1065
    %v1098 = vcvt.s32.f32 %v1066
    %v1099 = vcvt.s32.f32 %v1067
    %v1100 = vcvt.s32.f32 %v1068
    %v1101 = vcvt.s32.f32 %v1069
    %v1102 = vcvt.s32.f32 %v1070
    %v1103 = vcvt.s32.f32 %v1071
    %v1104 = vcvt.s32.f32 %v1072
    %v1105 = vcvt.s32.f32 %v1073
    %v1106 = vcvt.s32.f32 %v1074
    %v1107 = vcvt.s32.f32 %v1075
    %v1108 = vcvt.s32.f32 %v1076
    %v1109 = vcvt.s32.f32 %v1077
    %v1110 = vcvt.s32.f32 %v1078
    %v1111 = vcvt.s32.f32 %v1079
    %v1112 = vcvt.s32.f32 %v1080
    %v1113 = vcvt.s32.f32 %v1081
    %v1114 = vcvt.s32.f32 %v1082
    %v1115 = vcvt.s32.f32 %v1083
    %v1116 = vcvt.s32.f32 %v1084
    %v1117 = vcvt.s32.f32 %v1085
    %v1118 = vcvt.s32.f32 %v1086
    %v1119 = vpack.c.bf16 %v1088, %v1087
    %v1120 = vpack.c.bf16 %v1090, %v1089
    %v1121 = vpack.c.bf16 %v1092, %v1091
    %v1122 = vpack.c.bf16 %v1094, %v1093
    %v1123 = vpack.c.bf16 %v1096, %v1095
    %v1124 = vpack.c.bf16 %v1098, %v1097
    %v1125 = vpack.c.bf16 %v1100, %v1099
    %v1126 = vpack.c.bf16 %v1102, %v1101
    %v1127 = vpack.c.bf16 %v1104, %v1103
    %v1128 = vpack.c.bf16 %v1106, %v1105
    %v1129 = vpack.c.bf16 %v1108, %v1107
    %v1130 = vpack.c.bf16 %v1110, %v1109
    %v1131 = vpack.c.bf16 %v1112, %v1111
    %v1132 = vpack.c.bf16 %v1114, %v1113
    %v1133 = vpack.c.bf16 %v1116, %v1115
    %v1134 = vpack.c.bf16 %v1118, %v1117
    %v1135 = vadd.bf16 %v911, %v1119
    %v1136 = vadd.bf16 %v912, %v1120
    %v1137 = vadd.bf16 %v913, %v1121
    %v1138 = vadd.bf16 %v914, %v1122
    %v1139 = vadd.bf16 %v915, %v1123
    %v1140 = vadd.bf16 %v916, %v1124
    %v1141 = vadd.bf16 %v917, %v1125
    %v1142 = vadd.bf16 %v918, %v1126
    %v1143 = vadd.bf16 %v919, %v1127
    %v1144 = vadd.bf16 %v920, %v1128
    %v1145 = vadd.bf16 %v921, %v1129
    %v1146 = vadd.bf16 %v922, %v1130
    %v1147 = vadd.bf16 %v923, %v1131
    %v1148 = vadd.bf16 %v924, %v1132
    %v1149 = vadd.bf16 %v925, %v1133
    %v1150 = vadd.bf16 %v926, %v1134
    %v1151 = vld [vmem:[%s1] sm:$0xf]
    %v1152 = vld [vmem:[%s1 + $0x4] sm:$0xf]
    %v1153 = vld [vmem:[%s1 + $0x8] sm:$0xf]
    %v1154 = vld [vmem:[%s1 + $0xc] sm:$0xf]
    %v1155 = vld [vmem:[%s1 + $0x10] sm:$0xf]
    %v1156 = vld [vmem:[%s1 + $0x14] sm:$0xf]
    %v1157 = vld [vmem:[%s1 + $0x18] sm:$0xf]
    %v1158 = vld [vmem:[%s1 + $0x1c] sm:$0xf]
    %v1159 = vld [vmem:[%s1 + $0x20] sm:$0xf]
    %v1160 = vld [vmem:[%s1 + $0x24] sm:$0xf]
    %v1161 = vld [vmem:[%s1 + $0x28] sm:$0xf]
    %v1162 = vld [vmem:[%s1 + $0x2c] sm:$0xf]
    %v1163 = vld [vmem:[%s1 + $0x30] sm:$0xf]
    %v1164 = vld [vmem:[%s1 + $0x34] sm:$0xf]
    %v1165 = vld [vmem:[%s1 + $0x38] sm:$0xf]
    %v1166 = vld [vmem:[%s1 + $0x3c] sm:$0xf]
    %v1183 = vunpack.c.l.b16 %v1151
    %v1184 = vunpack.c.l.b16 %v1152
    %v1185 = vunpack.c.l.b16 %v1153
    %v1186 = vunpack.c.l.b16 %v1154
    %v1187 = vunpack.c.l.b16 %v1155
    %v1188 = vunpack.c.l.b16 %v1156
    %v1189 = vunpack.c.l.b16 %v1157
    %v1190 = vunpack.c.l.b16 %v1158
    %v1191 = vunpack.c.l.b16 %v1159
    %v1192 = vunpack.c.l.b16 %v1160
    %v1193 = vunpack.c.l.b16 %v1161
    %v1194 = vunpack.c.l.b16 %v1162
    %v1195 = vunpack.c.l.b16 %v1163
    %v1196 = vunpack.c.l.b16 %v1164
    %v1197 = vunpack.c.l.b16 %v1165
    %v1198 = vunpack.c.l.b16 %v1166
    %v1199 = vpack.c.b16 %v1184, %v1183
    %v1200 = vpack.c.b16 %v1186, %v1185
    %v1201 = vpack.c.b16 %v1188, %v1187
    %v1202 = vpack.c.b16 %v1190, %v1189
    %v1203 = vpack.c.b16 %v1192, %v1191
    %v1204 = vpack.c.b16 %v1194, %v1193
    %v1205 = vpack.c.b16 %v1196, %v1195
    %v1206 = vpack.c.b16 %v1198, %v1197
    %1215 = vmatprep.subr.bf16.mxu0 0
    %1216 = vmatpush1.bf16.msra.mxu0 %v1199
    %1217 = vmatprep.subr.bf16.mxu0 0
    %1218 = vmatpush1.bf16.msra.mxu0 %v1200
    %1219 = vmatprep.subr.bf16.mxu0 0
    %1220 = vmatpush1.bf16.msra.mxu0 %v1201
    %1221 = vmatprep.subr.bf16.mxu0 0
    %1222 = vmatpush1.bf16.msra.mxu0 %v1202
    %1223 = vmatprep.subr.bf16.mxu0 0
    %1224 = vmatpush1.bf16.msra.mxu0 %v1203
    %1225 = vmatprep.subr.bf16.mxu0 0
    %1226 = vmatpush1.bf16.msra.mxu0 %v1204
    %1227 = vmatprep.subr.bf16.mxu0 0
    %1228 = vmatpush1.bf16.msra.mxu0 %v1205
    %1229 = vmatprep.subr.bf16.mxu0 0
    %1230 = vmatpush1.bf16.msra.mxu0 %v1206
    %1231 = vmatprep.subr.bf16.mxu0 0
    %1232 = vmatpush1.bf16.msra.mxu0 0
    %1233 = vmatprep.subr.bf16.mxu0 0
    %1234 = vmatpush1.bf16.msra.mxu0 0
    %1235 = vmatprep.subr.bf16.mxu0 0
    %1236 = vmatpush1.bf16.msra.mxu0 0
    %1237 = vmatprep.subr.bf16.mxu0 0
    %1238 = vmatpush1.bf16.msra.mxu0 0
    %1239 = vmatprep.subr.bf16.mxu0 0
    %1240 = vmatpush1.bf16.msra.mxu0 0
    %1241 = vmatprep.subr.bf16.mxu0 0
    %1242 = vmatpush1.bf16.msra.mxu0 0
    %1243 = vmatprep.subr.bf16.mxu0 0
    %1244 = vmatpush1.bf16.msra.mxu0 0
    %1245 = vmatprep.subr.bf16.mxu0 0
    %1246 = vmatpush1.bf16.msra.mxu0 0
    %1247 = vmatprep.mubr.bf16.mxu0 0
    %1248 = vmatmul.mubr.bf16.gmra.mrb[0].mxu0 %v1135
    %v1249 = vpop.f32.mrb[0].mxu0
    %v1250 = vadd.f32 0.0, %v1249
    %v1251 = vpop.f32.mrb[0].mxu0
    %v1252 = vpop.f32.mrb[0].mxu0
    %v1253 = vadd.f32 0.0, %v1252
    %v1254 = vpop.f32.mrb[0].mxu0
    %1255 = vmatprep.mubr.bf16.mxu0 0
    %1256 = vmatmul.mubr.bf16.gmra.mrb[0].mxu0 %v1136
    %v1257 = vpop.f32.mrb[0].mxu0
    %v1258 = vadd.f32 0.0, %v1257
    %v1259 = vpop.f32.mrb[0].mxu0
    %v1260 = vpop.f32.mrb[0].mxu0
    %v1261 = vadd.f32 0.0, %v1260
    %v1262 = vpop.f32.mrb[0].mxu0
    %1263 = vmatprep.mubr.bf16.mxu0 0
    %1264 = vmatmul.mubr.bf16.gmra.mrb[0].mxu0 %v1137
    %v1265 = vpop.f32.mrb[0].mxu0
    %v1266 = vadd.f32 0.0, %v1265
    %v1267 = vpop.f32.mrb[0].mxu0
    %v1268 = vpop.f32.mrb[0].mxu0
    %v1269 = vadd.f32 0.0, %v1268
    %v1270 = vpop.f32.mrb[0].mxu0
    %1271 = vmatprep.mubr.bf16.mxu0 0
    %1272 = vmatmul.mubr.bf16.gmra.mrb[0].mxu0 %v1138
    %v1273 = vpop.f32.mrb[0].mxu0
    %v1274 = vadd.f32 0.0, %v1273
    %v1275 = vpop.f32.mrb[0].mxu0
    %v1276 = vpop.f32.mrb[0].mxu0
    %v1277 = vadd.f32 0.0, %v1276
    %v1278 = vpop.f32.mrb[0].mxu0
    %1279 = vmatprep.mubr.bf16.mxu0 0
    %1280 = vmatmul.mubr.bf16.gmra.mrb[0].mxu0 %v1139
    %v1281 = vpop.f32.mrb[0].mxu0
    %v1282 = vadd.f32 0.0, %v1281
    %v1283 = vpop.f32.mrb[0].mxu0
    %v1284 = vpop.f32.mrb[0].mxu0
    %v1285 = vadd.f32 0.0, %v1284
    %v1286 = vpop.f32.mrb[0].mxu0
    %1287 = vmatprep.mubr.bf16.mxu0 0
    %1288 = vmatmul.mubr.bf16.gmra.mrb[0].mxu0 %v1140
    %v1289 = vpop.f32.mrb[0].mxu0
    %v1290 = vadd.f32 0.0, %v1289
    %v1291 = vpop.f32.mrb[0].mxu0
    %v1292 = vpop.f32.mrb[0].mxu0
    %v1293 = vadd.f32 0.0, %v1292
    %v1294 = vpop.f32.mrb[0].mxu0
    %1295 = vmatprep.mubr.bf16.mxu0 0
    %1296 = vmatmul.mubr.bf16.gmra.mrb[0].mxu0 %v1141
    %v1297 = vpop.f32.mrb[0].mxu0
    %v1298 = vadd.f32 0.0, %v1297
    %v1299 = vpop.f32.mrb[0].mxu0
    %v1300 = vpop.f32.mrb[0].mxu0
    %v1301 = vadd.f32 0.0, %v1300
    %v1302 = vpop.f32.mrb[0].mxu0
    %1303 = vmatprep.mubr.bf16.mxu0 0
    %1304 = vmatmul.mubr.bf16.gmra.mrb[0].mxu0 %v1142
    %v1305 = vpop.f32.mrb[0].mxu0
    %v1306 = vadd.f32 0.0, %v1305
    %v1307 = vpop.f32.mrb[0].mxu0
    %v1308 = vpop.f32.mrb[0].mxu0
    %v1309 = vadd.f32 0.0, %v1308
    %v1310 = vpop.f32.mrb[0].mxu0
    %1311 = vmatprep.mubr.bf16.mxu0 0
    %1312 = vmatmul.mubr.bf16.gmra.mrb[0].mxu0 %v1143
    %v1313 = vpop.f32.mrb[0].mxu0
    %v1314 = vadd.f32 0.0, %v1313
    %v1315 = vpop.f32.mrb[0].mxu0
    %v1316 = vpop.f32.mrb[0].mxu0
    %v1317 = vadd.f32 0.0, %v1316
    %v1318 = vpop.f32.mrb[0].mxu0
    %1319 = vmatprep.mubr.bf16.mxu0 0
    %1320 = vmatmul.mubr.bf16.gmra.mrb[0].mxu0 %v1144
    %v1321 = vpop.f32.mrb[0].mxu0
    %v1322 = vadd.f32 0.0, %v1321
    %v1323 = vpop.f32.mrb[0].mxu0
    %v1324 = vpop.f32.mrb[0].mxu0
    %v1325 = vadd.f32 0.0, %v1324
    %v1326 = vpop.f32.mrb[0].mxu0
    %1327 = vmatprep.mubr.bf16.mxu0 0
    %1328 = vmatmul.mubr.bf16.gmra.mrb[0].mxu0 %v1145
    %v1329 = vpop.f32.mrb[0].mxu0
    %v1330 = vadd.f32 0.0, %v1329
    %v1331 = vpop.f32.mrb[0].mxu0
    %v1332 = vpop.f32.mrb[0].mxu0
    %v1333 = vadd.f32 0.0, %v1332
    %v1334 = vpop.f32.mrb[0].mxu0
    %1335 = vmatprep.mubr.bf16.mxu0 0
    %1336 = vmatmul.mubr.bf16.gmra.mrb[0].mxu0 %v1146
    %v1337 = vpop.f32.mrb[0].mxu0
    %v1338 = vadd.f32 0.0, %v1337
    %v1339 = vpop.f32.mrb[0].mxu0
    %v1340 = vpop.f32.mrb[0].mxu0
    %v1341 = vadd.f32 0.0, %v1340
    %v1342 = vpop.f32.mrb[0].mxu0
    %1343 = vmatprep.mubr.bf16.mxu0 0
    %1344 = vmatmul.mubr.bf16.gmra.mrb[0].mxu0 %v1147
    %v1345 = vpop.f32.mrb[0].mxu0
    %v1346 = vadd.f32 0.0, %v1345
    %v1347 = vpop.f32.mrb[0].mxu0
    %v1348 = vpop.f32.mrb[0].mxu0
    %v1349 = vadd.f32 0.0, %v1348
    %v1350 = vpop.f32.mrb[0].mxu0
    %1351 = vmatprep.mubr.bf16.mxu0 0
    %1352 = vmatmul.mubr.bf16.gmra.mrb[0].mxu0 %v1148
    %v1353 = vpop.f32.mrb[0].mxu0
    %v1354 = vadd.f32 0.0, %v1353
    %v1355 = vpop.f32.mrb[0].mxu0
    %v1356 = vpop.f32.mrb[0].mxu0
    %v1357 = vadd.f32 0.0, %v1356
    %v1358 = vpop.f32.mrb[0].mxu0
    %1359 = vmatprep.mubr.bf16.mxu0 0
    %1360 = vmatmul.mubr.bf16.gmra.mrb[0].mxu0 %v1149
    %v1361 = vpop.f32.mrb[0].mxu0
    %v1362 = vadd.f32 0.0, %v1361
    %v1363 = vpop.f32.mrb[0].mxu0
    %v1364 = vpop.f32.mrb[0].mxu0
    %v1365 = vadd.f32 0.0, %v1364
    %v1366 = vpop.f32.mrb[0].mxu0
    %1367 = vmatprep.mubr.bf16.mxu0 0
    %1368 = vmatmul.mubr.bf16.gmra.mrb[0].mxu0 %v1150
    %v1369 = vpop.f32.mrb[0].mxu0
    %v1370 = vadd.f32 0.0, %v1369
    %v1371 = vpop.f32.mrb[0].mxu0
    %v1372 = vpop.f32.mrb[0].mxu0
    %v1373 = vadd.f32 0.0, %v1372
    %v1374 = vpop.f32.mrb[0].mxu0
    %1375 = vdwg.mxu0
    %v1376 = vpack.c.bf16 %v1253, %v1250
    %v1377 = vpack.c.bf16 %v1261, %v1258
    %v1378 = vpack.c.bf16 %v1269, %v1266
    %v1379 = vpack.c.bf16 %v1277, %v1274
    %v1380 = vpack.c.bf16 %v1285, %v1282
    %v1381 = vpack.c.bf16 %v1293, %v1290
    %v1382 = vpack.c.bf16 %v1301, %v1298
    %v1383 = vpack.c.bf16 %v1309, %v1306
    %v1384 = vpack.c.bf16 %v1317, %v1314
    %v1385 = vpack.c.bf16 %v1325, %v1322
    %v1386 = vpack.c.bf16 %v1333, %v1330
    %v1387 = vpack.c.bf16 %v1341, %v1338
    %v1388 = vpack.c.bf16 %v1349, %v1346
    %v1389 = vpack.c.bf16 %v1357, %v1354
    %v1390 = vpack.c.bf16 %v1365, %v1362
    %v1391 = vpack.c.bf16 %v1373, %v1370
    %v1408 = vunpack.c.l.b16 %v1376
    %v1409 = vunpack.c.h.b16 %v1376
    %v1410 = vunpack.c.l.b16 %v1377
    %v1411 = vunpack.c.h.b16 %v1377
    %v1412 = vunpack.c.l.b16 %v1378
    %v1413 = vunpack.c.h.b16 %v1378
    %v1414 = vunpack.c.l.b16 %v1379
    %v1415 = vunpack.c.h.b16 %v1379
    %v1416 = vunpack.c.l.b16 %v1380
    %v1417 = vunpack.c.h.b16 %v1380
    %v1418 = vunpack.c.l.b16 %v1381
    %v1419 = vunpack.c.h.b16 %v1381
    %v1420 = vunpack.c.l.b16 %v1382
    %v1421 = vunpack.c.h.b16 %v1382
    %v1422 = vunpack.c.l.b16 %v1383
    %v1423 = vunpack.c.h.b16 %v1383
    %v1424 = vunpack.c.l.b16 %v1384
    %v1425 = vunpack.c.h.b16 %v1384
    %v1426 = vunpack.c.l.b16 %v1385
    %v1427 = vunpack.c.h.b16 %v1385
    %v1428 = vunpack.c.l.b16 %v1386
    %v1429 = vunpack.c.h.b16 %v1386
    %v1430 = vunpack.c.l.b16 %v1387
    %v1431 = vunpack.c.h.b16 %v1387
    %v1432 = vunpack.c.l.b16 %v1388
    %v1433 = vunpack.c.h.b16 %v1388
    %v1434 = vunpack.c.l.b16 %v1389
    %v1435 = vunpack.c.h.b16 %v1389
    %v1436 = vunpack.c.l.b16 %v1390
    %v1437 = vunpack.c.h.b16 %v1390
    %v1438 = vunpack.c.l.b16 %v1391
    %v1439 = vunpack.c.h.b16 %v1391
    %v1440 = vpack.c.b16 %v1408, %v1408
    %v1441 = vpack.c.b16 %v1409, %v1409
    %v1442 = vpack.c.b16 %v1410, %v1410
    %v1443 = vpack.c.b16 %v1411, %v1411
    %v1444 = vpack.c.b16 %v1412, %v1412
    %v1445 = vpack.c.b16 %v1413, %v1413
    %v1446 = vpack.c.b16 %v1414, %v1414
    %v1447 = vpack.c.b16 %v1415, %v1415
    %v1448 = vpack.c.b16 %v1416, %v1416
    %v1449 = vpack.c.b16 %v1417, %v1417
    %v1450 = vpack.c.b16 %v1418, %v1418
    %v1451 = vpack.c.b16 %v1419, %v1419
    %v1452 = vpack.c.b16 %v1420, %v1420
    %v1453 = vpack.c.b16 %v1421, %v1421
    %v1454 = vpack.c.b16 %v1422, %v1422
    %v1455 = vpack.c.b16 %v1423, %v1423
    %v1456 = vpack.c.b16 %v1424, %v1424
    %v1457 = vpack.c.b16 %v1425, %v1425
    %v1458 = vpack.c.b16 %v1426, %v1426
    %v1459 = vpack.c.b16 %v1427, %v1427
    %v1460 = vpack.c.b16 %v1428, %v1428
    %v1461 = vpack.c.b16 %v1429, %v1429
    %v1462 = vpack.c.b16 %v1430, %v1430
    %v1463 = vpack.c.b16 %v1431, %v1431
    %v1464 = vpack.c.b16 %v1432, %v1432
    %v1465 = vpack.c.b16 %v1433, %v1433
    %v1466 = vpack.c.b16 %v1434, %v1434
    %v1467 = vpack.c.b16 %v1435, %v1435
    %v1468 = vpack.c.b16 %v1436, %v1436
    %v1469 = vpack.c.b16 %v1437, %v1437
    %v1470 = vpack.c.b16 %v1438, %v1438
    %v1471 = vpack.c.b16 %v1439, %v1439
    %1504 = vst [vmem:[#allocation2] sm:$0xf] %v1440
    %1505 = vst [vmem:[#allocation2 + $0x4] sm:$0xf] %v1441
    %1506 = vst [vmem:[#allocation2 + $0x8] sm:$0xf] %v1442
    %1507 = vst [vmem:[#allocation2 + $0xc] sm:$0xf] %v1443
    %1508 = vst [vmem:[#allocation2 + $0x10] sm:$0xf] %v1444
    %1509 = vst [vmem:[#allocation2 + $0x14] sm:$0xf] %v1445
    %1510 = vst [vmem:[#allocation2 + $0x18] sm:$0xf] %v1446
    %1511 = vst [vmem:[#allocation2 + $0x1c] sm:$0xf] %v1447
    %1512 = vst [vmem:[#allocation2 + $0x20] sm:$0xf] %v1448
    %1513 = vst [vmem:[#allocation2 + $0x24] sm:$0xf] %v1449
    %1514 = vst [vmem:[#allocation2 + $0x28] sm:$0xf] %v1450
    %1515 = vst [vmem:[#allocation2 + $0x2c] sm:$0xf] %v1451
    %1516 = vst [vmem:[#allocation2 + $0x30] sm:$0xf] %v1452
    %1517 = vst [vmem:[#allocation2 + $0x34] sm:$0xf] %v1453
    %1518 = vst [vmem:[#allocation2 + $0x38] sm:$0xf] %v1454
    %1519 = vst [vmem:[#allocation2 + $0x3c] sm:$0xf] %v1455
    %1520 = vst [vmem:[#allocation2 + $0x40] sm:$0xf] %v1456
    %1521 = vst [vmem:[#allocation2 + $0x44] sm:$0xf] %v1457
    %1522 = vst [vmem:[#allocation2 + $0x48] sm:$0xf] %v1458
    %1523 = vst [vmem:[#allocation2 + $0x4c] sm:$0xf] %v1459
    %1524 = vst [vmem:[#allocation2 + $0x50] sm:$0xf] %v1460
    %1525 = vst [vmem:[#allocation2 + $0x54] sm:$0xf] %v1461
    %1526 = vst [vmem:[#allocation2 + $0x58] sm:$0xf] %v1462
    %1527 = vst [vmem:[#allocation2 + $0x5c] sm:$0xf] %v1463
    %1528 = vst [vmem:[#allocation2 + $0x60] sm:$0xf] %v1464
    %1529 = vst [vmem:[#allocation2 + $0x64] sm:$0xf] %v1465
    %1530 = vst [vmem:[#allocation2 + $0x68] sm:$0xf] %v1466
    %1531 = vst [vmem:[#allocation2 + $0x6c] sm:$0xf] %v1467
    %1532 = vst [vmem:[#allocation2 + $0x70] sm:$0xf] %v1468
    %1533 = vst [vmem:[#allocation2 + $0x74] sm:$0xf] %v1469
    %1534 = vst [vmem:[#allocation2 + $0x78] sm:$0xf] %v1470
    %1535 = vst [vmem:[#allocation2 + $0x7c] sm:$0xf] %v1471
    // Predicated region
    $region10: #{tpu_custom_call.1} parent=1 // pred_check
      _
    $region11: #{tpu_custom_call.1} parent=1 // pred_check_branch
      %1537 = sbr.rel (0) target = $region13
    $region12: #{tpu_custom_call.1} parent=1 // pred_region
      %s1539 = ssub.s32 2048, 2048
      %1540 = vsyncadd [#allocation3], %s1539
      %s1541 = sshll.u32 [#allocation2], 4
      %s1542 = int_to_ptr.vmem [resolvable:$true] %s1541
      %1547 = dma.vmem_to_hbm [thread:$0]  %s1542, 2048, %s2, [#allocation3], 64, 64, 4
    $region13: #{tpu_custom_call.1} parent=1 // pred_fallthru
      _
    // Predicated region
    $region14: #{tpu_custom_call.1} parent=1 // pred_check
      _
    $region15: #{tpu_custom_call.1} parent=1 // pred_check_branch
      %1549 = sbr.rel (0) target = $region17
    $region16: #{tpu_custom_call.1} parent=1 // pred_region
      %1550 = dma.done [#allocation3], 2048
    $region17: #{tpu_custom_call.1} parent=1 // pred_fallthru
      _
    %1551 = vsyncpa [#allocation3], 1

// kernel: tpu_custom_call.1
$region0: #{tpu_custom_call.1}
  #allocation0 [shape = 'u32[]', space=smem, size = 0x4, offset = 0x4, fixed_abs, tag = 'smem constant byte address 0x4 - core index']
  #allocation1 [shape = 'u32[144,128]{1,0:T(1,128)}', space=vmem, size = 0x12000, scoped, tag = 'internal scratch']
  %s0 = inlined_call_operand.vmem [shape: s32[256,5], index: 0, kind: input, shape index: {}]
  %s1 = inlined_call_operand.vmem [shape: bf16[128,128], index: 1, kind: input, shape index: {}]
  %s2 = inlined_call_operand.hbm [shape: bf16[256,128], index: 2, kind: output, shape index: {}]
  %s3 = sld [smem:[#allocation0]]
  $region18: #{tpu_custom_call.1} parent=0
    _
  %s5 = ssub.s32 1, %s3
  %s6 = scalar_select 0, %s5, %s3
  $region1: #{tpu_custom_call.1} parent=0
    #allocation2 [shape = 'u8[65536]{0}', space=vmem, size = 0x10000, scoped, tag = 'output window, operand 0, single buffered']
    #allocation3 [shape = 's32[1]{0}', space=sflag, size = 0x4, scoped, tag = 'scoped memory for tpu_custom_call.1']
    %7 = vsyncpa [#allocation3], 0
    // Predicated region
    $region2: #{tpu_custom_call.1} parent=1 // pred_check
      _
    $region3: #{tpu_custom_call.1} parent=1 // pred_check_branch
      %9 = sbr.rel (0) target = $region5
    $region4: #{tpu_custom_call.1} parent=1 // pred_region
      _
    $region5: #{tpu_custom_call.1} parent=1 // pred_fallthru
      _
    // Predicated region
    $region6: #{tpu_custom_call.1} parent=1 // pred_check
      _
    $region7: #{tpu_custom_call.1} parent=1 // pred_check_branch
      %11 = sbr.rel (0) target = $region9
    $region8: #{tpu_custom_call.1} parent=1 // pred_region
      _
    $region9: #{tpu_custom_call.1} parent=1 // pred_fallthru
      _
    %v13 = vld [vmem:[%s0] sm:$0xff]
    %v14 = vld [vmem:[%s0 + $0x8] sm:$0xff]
    %v15 = vld [vmem:[%s0 + $0x10] sm:$0xff]
    %v16 = vld [vmem:[%s0 + $0x18] sm:$0xff]
    %v17 = vld [vmem:[%s0 + $0x20] sm:$0xff]
    %v18 = vld [vmem:[%s0 + $0x28] sm:$0xff]
    %v19 = vld [vmem:[%s0 + $0x30] sm:$0xff]
    %v20 = vld [vmem:[%s0 + $0x38] sm:$0xff]
    %v21 = vld [vmem:[%s0 + $0x40] sm:$0xff]
    %v22 = vld [vmem:[%s0 + $0x48] sm:$0xff]
    %v23 = vld [vmem:[%s0 + $0x50] sm:$0xff]
    %v24 = vld [vmem:[%s0 + $0x58] sm:$0xff]
    %v25 = vld [vmem:[%s0 + $0x60] sm:$0xff]
    %v26 = vld [vmem:[%s0 + $0x68] sm:$0xff]
    %v27 = vld [vmem:[%s0 + $0x70] sm:$0xff]
    %v28 = vld [vmem:[%s0 + $0x78] sm:$0xff]
    %v29 = vld [vmem:[%s0 + $0x80] sm:$0xff]
    %v30 = vld [vmem:[%s0 + $0x88] sm:$0xff]
    %v31 = vld [vmem:[%s0 + $0x90] sm:$0xff]
    %v32 = vld [vmem:[%s0 + $0x98] sm:$0xff]
    %v33 = vld [vmem:[%s0 + $0xa0] sm:$0xff]
    %v34 = vld [vmem:[%s0 + $0xa8] sm:$0xff]
    %v35 = vld [vmem:[%s0 + $0xb0] sm:$0xff]
    %v36 = vld [vmem:[%s0 + $0xb8] sm:$0xff]
    %v37 = vld [vmem:[%s0 + $0xc0] sm:$0xff]
    %v38 = vld [vmem:[%s0 + $0xc8] sm:$0xff]
    %v39 = vld [vmem:[%s0 + $0xd0] sm:$0xff]
    %v40 = vld [vmem:[%s0 + $0xd8] sm:$0xff]
    %v41 = vld [vmem:[%s0 + $0xe0] sm:$0xff]
    %v42 = vld [vmem:[%s0 + $0xe8] sm:$0xff]
    %v43 = vld [vmem:[%s0 + $0xf0] sm:$0xff]
    %v44 = vld [vmem:[%s0 + $0xf8] sm:$0xff]
    %v45 = vlaneseq
    %v46 = vand.u32 %v45, 127
    %47 = vset.pattern.permute.xlu0 0
    %48 = vperm.xlu0 %47, %v13
    %v49 = vpop.permute.xlu0 %48
    %50 = vset.pattern.permute.xlu0 0
    %51 = vperm.xlu0 %50, %v14
    %v52 = vpop.permute.xlu0 %51
    %53 = vset.pattern.permute.xlu0 0
    %54 = vperm.xlu0 %53, %v15
    %v55 = vpop.permute.xlu0 %54
    %56 = vset.pattern.permute.xlu0 0
    %57 = vperm.xlu0 %56, %v16
    %v58 = vpop.permute.xlu0 %57
    %59 = vset.pattern.permute.xlu0 0
    %60 = vperm.xlu0 %59, %v17
    %v61 = vpop.permute.xlu0 %60
    %62 = vset.pattern.permute.xlu0 0
    %63 = vperm.xlu0 %62, %v18
    %v64 = vpop.permute.xlu0 %63
    %65 = vset.pattern.permute.xlu0 0
    %66 = vperm.xlu0 %65, %v19
    %v67 = vpop.permute.xlu0 %66
    %68 = vset.pattern.permute.xlu0 0
    %69 = vperm.xlu0 %68, %v20
    %v70 = vpop.permute.xlu0 %69
    %71 = vset.pattern.permute.xlu0 0
    %72 = vperm.xlu0 %71, %v21
    %v73 = vpop.permute.xlu0 %72
    %74 = vset.pattern.permute.xlu0 0
    %75 = vperm.xlu0 %74, %v22
    %v76 = vpop.permute.xlu0 %75
    %77 = vset.pattern.permute.xlu0 0
    %78 = vperm.xlu0 %77, %v23
    %v79 = vpop.permute.xlu0 %78
    %80 = vset.pattern.permute.xlu0 0
    %81 = vperm.xlu0 %80, %v24
    %v82 = vpop.permute.xlu0 %81
    %83 = vset.pattern.permute.xlu0 0
    %84 = vperm.xlu0 %83, %v25
    %v85 = vpop.permute.xlu0 %84
    %86 = vset.pattern.permute.xlu0 0
    %87 = vperm.xlu0 %86, %v26
    %v88 = vpop.permute.xlu0 %87
    %89 = vset.pattern.permute.xlu0 0
    %90 = vperm.xlu0 %89, %v27
    %v91 = vpop.permute.xlu0 %90
    %92 = vset.pattern.permute.xlu0 0
    %93 = vperm.xlu0 %92, %v28
    %v94 = vpop.permute.xlu0 %93
    %95 = vset.pattern.permute.xlu0 0
    %96 = vperm.xlu0 %95, %v29
    %v97 = vpop.permute.xlu0 %96
    %98 = vset.pattern.permute.xlu0 0
    %99 = vperm.xlu0 %98, %v30
    %v100 = vpop.permute.xlu0 %99
    %101 = vset.pattern.permute.xlu0 0
    %102 = vperm.xlu0 %101, %v31
    %v103 = vpop.permute.xlu0 %102
    %104 = vset.pattern.permute.xlu0 0
    %105 = vperm.xlu0 %104, %v32
    %v106 = vpop.permute.xlu0 %105
    %107 = vset.pattern.permute.xlu0 0
    %108 = vperm.xlu0 %107, %v33
    %v109 = vpop.permute.xlu0 %108
    %110 = vset.pattern.permute.xlu0 0
    %111 = vperm.xlu0 %110, %v34
    %v112 = vpop.permute.xlu0 %111
    %113 = vset.pattern.permute.xlu0 0
    %114 = vperm.xlu0 %113, %v35
    %v115 = vpop.permute.xlu0 %114
    %116 = vset.pattern.permute.xlu0 0
    %117 = vperm.xlu0 %116, %v36
    %v118 = vpop.permute.xlu0 %117
    %119 = vset.pattern.permute.xlu0 0
    %120 = vperm.xlu0 %119, %v37
    %v121 = vpop.permute.xlu0 %120
    %122 = vset.pattern.permute.xlu0 0
    %123 = vperm.xlu0 %122, %v38
    %v124 = vpop.permute.xlu0 %123
    %125 = vset.pattern.permute.xlu0 0
    %126 = vperm.xlu0 %125, %v39
    %v127 = vpop.permute.xlu0 %126
    %128 = vset.pattern.permute.xlu0 0
    %129 = vperm.xlu0 %128, %v40
    %v130 = vpop.permute.xlu0 %129
    %131 = vset.pattern.permute.xlu0 0
    %132 = vperm.xlu0 %131, %v41
    %v133 = vpop.permute.xlu0 %132
    %134 = vset.pattern.permute.xlu0 0
    %135 = vperm.xlu0 %134, %v42
    %v136 = vpop.permute.xlu0 %135
    %137 = vset.pattern.permute.xlu0 0
    %138 = vperm.xlu0 %137, %v43
    %v139 = vpop.permute.xlu0 %138
    %140 = vset.pattern.permute.xlu0 0
    %141 = vperm.xlu0 %140, %v44
    %v142 = vpop.permute.xlu0 %141
    %vm143 = vcmp.eq.s32.totalorder %v46, %v49
    %vm144 = vcmp.eq.s32.totalorder %v46, %v52
    %vm145 = vcmp.eq.s32.totalorder %v46, %v55
    %vm146 = vcmp.eq.s32.totalorder %v46, %v58
    %vm147 = vcmp.eq.s32.totalorder %v46, %v61
    %vm148 = vcmp.eq.s32.totalorder %v46, %v64
    %vm149 = vcmp.eq.s32.totalorder %v46, %v67
    %vm150 = vcmp.eq.s32.totalorder %v46, %v70
    %vm151 = vcmp.eq.s32.totalorder %v46, %v73
    %vm152 = vcmp.eq.s32.totalorder %v46, %v76
    %vm153 = vcmp.eq.s32.totalorder %v46, %v79
    %vm154 = vcmp.eq.s32.totalorder %v46, %v82
    %vm155 = vcmp.eq.s32.totalorder %v46, %v85
    %vm156 = vcmp.eq.s32.totalorder %v46, %v88
    %vm157 = vcmp.eq.s32.totalorder %v46, %v91
    %vm158 = vcmp.eq.s32.totalorder %v46, %v94
    %vm159 = vcmp.eq.s32.totalorder %v46, %v97
    %vm160 = vcmp.eq.s32.totalorder %v46, %v100
    %vm161 = vcmp.eq.s32.totalorder %v46, %v103
    %vm162 = vcmp.eq.s32.totalorder %v46, %v106
    %vm163 = vcmp.eq.s32.totalorder %v46, %v109
    %vm164 = vcmp.eq.s32.totalorder %v46, %v112
    %vm165 = vcmp.eq.s32.totalorder %v46, %v115
    %vm166 = vcmp.eq.s32.totalorder %v46, %v118
    %vm167 = vcmp.eq.s32.totalorder %v46, %v121
    %vm168 = vcmp.eq.s32.totalorder %v46, %v124
    %vm169 = vcmp.eq.s32.totalorder %v46, %v127
    %vm170 = vcmp.eq.s32.totalorder %v46, %v130
    %vm171 = vcmp.eq.s32.totalorder %v46, %v133
    %vm172 = vcmp.eq.s32.totalorder %v46, %v136
    %vm173 = vcmp.eq.s32.totalorder %v46, %v139
    %vm174 = vcmp.eq.s32.totalorder %v46, %v142
    %v175 = vsel %vm143, 1, 0
    %v176 = vsel %vm144, 1, 0
    %v177 = vsel %vm145, 1, 0
    %v178 = vsel %vm146, 1, 0
    %v179 = vsel %vm147, 1, 0
    %v180 = vsel %vm148, 1, 0
    %v181 = vsel %vm149, 1, 0
    %v182 = vsel %vm150, 1, 0
    %v183 = vsel %vm151, 1, 0
    %v184 = vsel %vm152, 1, 0
    %v185 = vsel %vm153, 1, 0
    %v186 = vsel %vm154, 1, 0
    %v187 = vsel %vm155, 1, 0
    %v188 = vsel %vm156, 1, 0
    %v189 = vsel %vm157, 1, 0
    %v190 = vsel %vm158, 1, 0
    %v191 = vsel %vm159, 1, 0
    %v192 = vsel %vm160, 1, 0
    %v193 = vsel %vm161, 1, 0
    %v194 = vsel %vm162, 1, 0
    %v195 = vsel %vm163, 1, 0
    %v196 = vsel %vm164, 1, 0
    %v197 = vsel %vm165, 1, 0
    %v198 = vsel %vm166, 1, 0
    %v199 = vsel %vm167, 1, 0
    %v200 = vsel %vm168, 1, 0
    %v201 = vsel %vm169, 1, 0
    %v202 = vsel %vm170, 1, 0
    %v203 = vsel %vm171, 1, 0
    %v204 = vsel %vm172, 1, 0
    %v205 = vsel %vm173, 1, 0
    %v206 = vsel %vm174, 1, 0
    %v207 = vcvt.s32.f32 %v175
    %v208 = vcvt.s32.f32 %v176
    %v209 = vcvt.s32.f32 %v177
    %v210 = vcvt.s32.f32 %v178
    %v211 = vcvt.s32.f32 %v179
    %v212 = vcvt.s32.f32 %v180
    %v213 = vcvt.s32.f32 %v181
    %v214 = vcvt.s32.f32 %v182
    %v215 = vcvt.s32.f32 %v183
    %v216 = vcvt.s32.f32 %v184
    %v217 = vcvt.s32.f32 %v185
    %v218 = vcvt.s32.f32 %v186
    %v219 = vcvt.s32.f32 %v187
    %v220 = vcvt.s32.f32 %v188
    %v221 = vcvt.s32.f32 %v189
    %v222 = vcvt.s32.f32 %v190
    %v223 = vcvt.s32.f32 %v191
    %v224 = vcvt.s32.f32 %v192
    %v225 = vcvt.s32.f32 %v193
    %v226 = vcvt.s32.f32 %v194
    %v227 = vcvt.s32.f32 %v195
    %v228 = vcvt.s32.f32 %v196
    %v229 = vcvt.s32.f32 %v197
    %v230 = vcvt.s32.f32 %v198
    %v231 = vcvt.s32.f32 %v199
    %v232 = vcvt.s32.f32 %v200
    %v233 = vcvt.s32.f32 %v201
    %v234 = vcvt.s32.f32 %v202
    %v235 = vcvt.s32.f32 %v203
    %v236 = vcvt.s32.f32 %v204
    %v237 = vcvt.s32.f32 %v205
    %v238 = vcvt.s32.f32 %v206
    %v239 = vpack.c.bf16 %v208, %v207
    %v240 = vpack.c.bf16 %v210, %v209
    %v241 = vpack.c.bf16 %v212, %v211
    %v242 = vpack.c.bf16 %v214, %v213
    %v243 = vpack.c.bf16 %v216, %v215
    %v244 = vpack.c.bf16 %v218, %v217
    %v245 = vpack.c.bf16 %v220, %v219
    %v246 = vpack.c.bf16 %v222, %v221
    %v247 = vpack.c.bf16 %v224, %v223
    %v248 = vpack.c.bf16 %v226, %v225
    %v249 = vpack.c.bf16 %v228, %v227
    %v250 = vpack.c.bf16 %v230, %v229
    %v251 = vpack.c.bf16 %v232, %v231
    %v252 = vpack.c.bf16 %v234, %v233
    %v253 = vpack.c.bf16 %v236, %v235
    %v254 = vpack.c.bf16 %v238, %v237
    %255 = vset.pattern.permute.xlu0 1
    %256 = vperm.xlu0 %255, %v13
    %v257 = vpop.permute.xlu0 %256
    %258 = vset.pattern.permute.xlu0 1
    %259 = vperm.xlu0 %258, %v14
    %v260 = vpop.permute.xlu0 %259
    %261 = vset.pattern.permute.xlu0 1
    %262 = vperm.xlu0 %261, %v15
    %v263 = vpop.permute.xlu0 %262
    %264 = vset.pattern.permute.xlu0 1
    %265 = vperm.xlu0 %264, %v16
    %v266 = vpop.permute.xlu0 %265
    %267 = vset.pattern.permute.xlu0 1
    %268 = vperm.xlu0 %267, %v17
    %v269 = vpop.permute.xlu0 %268
    %270 = vset.pattern.permute.xlu0 1
    %271 = vperm.xlu0 %270, %v18
    %v272 = vpop.permute.xlu0 %271
    %273 = vset.pattern.permute.xlu0 1
    %274 = vperm.xlu0 %273, %v19
    %v275 = vpop.permute.xlu0 %274
    %276 = vset.pattern.permute.xlu0 1
    %277 = vperm.xlu0 %276, %v20
    %v278 = vpop.permute.xlu0 %277
    %279 = vset.pattern.permute.xlu0 1
    %280 = vperm.xlu0 %279, %v21
    %v281 = vpop.permute.xlu0 %280
    %282 = vset.pattern.permute.xlu0 1
    %283 = vperm.xlu0 %282, %v22
    %v284 = vpop.permute.xlu0 %283
    %285 = vset.pattern.permute.xlu0 1
    %286 = vperm.xlu0 %285, %v23
    %v287 = vpop.permute.xlu0 %286
    %288 = vset.pattern.permute.xlu0 1
    %289 = vperm.xlu0 %288, %v24
    %v290 = vpop.permute.xlu0 %289
    %291 = vset.pattern.permute.xlu0 1
    %292 = vperm.xlu0 %291, %v25
    %v293 = vpop.permute.xlu0 %292
    %294 = vset.pattern.permute.xlu0 1
    %295 = vperm.xlu0 %294, %v26
    %v296 = vpop.permute.xlu0 %295
    %297 = vset.pattern.permute.xlu0 1
    %298 = vperm.xlu0 %297, %v27
    %v299 = vpop.permute.xlu0 %298
    %300 = vset.pattern.permute.xlu0 1
    %301 = vperm.xlu0 %300, %v28
    %v302 = vpop.permute.xlu0 %301
    %303 = vset.pattern.permute.xlu0 1
    %304 = vperm.xlu0 %303, %v29
    %v305 = vpop.permute.xlu0 %304
    %306 = vset.pattern.permute.xlu0 1
    %307 = vperm.xlu0 %306, %v30
    %v308 = vpop.permute.xlu0 %307
    %309 = vset.pattern.permute.xlu0 1
    %310 = vperm.xlu0 %309, %v31
    %v311 = vpop.permute.xlu0 %310
    %312 = vset.pattern.permute.xlu0 1
    %313 = vperm.xlu0 %312, %v32
    %v314 = vpop.permute.xlu0 %313
    %315 = vset.pattern.permute.xlu0 1
    %316 = vperm.xlu0 %315, %v33
    %v317 = vpop.permute.xlu0 %316
    %318 = vset.pattern.permute.xlu0 1
    %319 = vperm.xlu0 %318, %v34
    %v320 = vpop.permute.xlu0 %319
    %321 = vset.pattern.permute.xlu0 1
    %322 = vperm.xlu0 %321, %v35
    %v323 = vpop.permute.xlu0 %322
    %324 = vset.pattern.permute.xlu0 1
    %325 = vperm.xlu0 %324, %v36
    %v326 = vpop.permute.xlu0 %325
    %327 = vset.pattern.permute.xlu0 1
    %328 = vperm.xlu0 %327, %v37
    %v329 = vpop.permute.xlu0 %328
    %330 = vset.pattern.permute.xlu0 1
    %331 = vperm.xlu0 %330, %v38
    %v332 = vpop.permute.xlu0 %331
    %333 = vset.pattern.permute.xlu0 1
    %334 = vperm.xlu0 %333, %v39
    %v335 = vpop.permute.xlu0 %334
    %336 = vset.pattern.permute.xlu0 1
    %337 = vperm.xlu0 %336, %v40
    %v338 = vpop.permute.xlu0 %337
    %339 = vset.pattern.permute.xlu0 1
    %340 = vperm.xlu0 %339, %v41
    %v341 = vpop.permute.xlu0 %340
    %342 = vset.pattern.permute.xlu0 1
    %343 = vperm.xlu0 %342, %v42
    %v344 = vpop.permute.xlu0 %343
    %345 = vset.pattern.permute.xlu0 1
    %346 = vperm.xlu0 %345, %v43
    %v347 = vpop.permute.xlu0 %346
    %348 = vset.pattern.permute.xlu0 1
    %349 = vperm.xlu0 %348, %v44
    %v350 = vpop.permute.xlu0 %349
    %vm351 = vcmp.eq.s32.totalorder %v46, %v257
    %vm352 = vcmp.eq.s32.totalorder %v46, %v260
    %vm353 = vcmp.eq.s32.totalorder %v46, %v263
    %vm354 = vcmp.eq.s32.totalorder %v46, %v266
    %vm355 = vcmp.eq.s32.totalorder %v46, %v269
    %vm356 = vcmp.eq.s32.totalorder %v46, %v272
    %vm357 = vcmp.eq.s32.totalorder %v46, %v275
    %vm358 = vcmp.eq.s32.totalorder %v46, %v278
    %vm359 = vcmp.eq.s32.totalorder %v46, %v281
    %vm360 = vcmp.eq.s32.totalorder %v46, %v284
    %vm361 = vcmp.eq.s32.totalorder %v46, %v287
    %vm362 = vcmp.eq.s32.totalorder %v46, %v290
    %vm363 = vcmp.eq.s32.totalorder %v46, %v293
    %vm364 = vcmp.eq.s32.totalorder %v46, %v296
    %vm365 = vcmp.eq.s32.totalorder %v46, %v299
    %vm366 = vcmp.eq.s32.totalorder %v46, %v302
    %vm367 = vcmp.eq.s32.totalorder %v46, %v305
    %vm368 = vcmp.eq.s32.totalorder %v46, %v308
    %vm369 = vcmp.eq.s32.totalorder %v46, %v311
    %vm370 = vcmp.eq.s32.totalorder %v46, %v314
    %vm371 = vcmp.eq.s32.totalorder %v46, %v317
    %vm372 = vcmp.eq.s32.totalorder %v46, %v320
    %vm373 = vcmp.eq.s32.totalorder %v46, %v323
    %vm374 = vcmp.eq.s32.totalorder %v46, %v326
    %vm375 = vcmp.eq.s32.totalorder %v46, %v329
    %vm376 = vcmp.eq.s32.totalorder %v46, %v332
    %vm377 = vcmp.eq.s32.totalorder %v46, %v335
    %vm378 = vcmp.eq.s32.totalorder %v46, %v338
    %vm379 = vcmp.eq.s32.totalorder %v46, %v341
    %vm380 = vcmp.eq.s32.totalorder %v46, %v344
    %vm381 = vcmp.eq.s32.totalorder %v46, %v347
    %vm382 = vcmp.eq.s32.totalorder %v46, %v350
    %v383 = vsel %vm351, 1, 0
    %v384 = vsel %vm352, 1, 0
    %v385 = vsel %vm353, 1, 0
    %v386 = vsel %vm354, 1, 0
    %v387 = vsel %vm355, 1, 0
    %v388 = vsel %vm356, 1, 0
    %v389 = vsel %vm357, 1, 0
    %v390 = vsel %vm358, 1, 0
    %v391 = vsel %vm359, 1, 0
    %v392 = vsel %vm360, 1, 0
    %v393 = vsel %vm361, 1, 0
    %v394 = vsel %vm362, 1, 0
    %v395 = vsel %vm363, 1, 0
    %v396 = vsel %vm364, 1, 0
    %v397 = vsel %vm365, 1, 0
    %v398 = vsel %vm366, 1, 0
    %v399 = vsel %vm367, 1, 0
    %v400 = vsel %vm368, 1, 0
    %v401 = vsel %vm369, 1, 0
    %v402 = vsel %vm370, 1, 0
    %v403 = vsel %vm371, 1, 0
    %v404 = vsel %vm372, 1, 0
    %v405 = vsel %vm373, 1, 0
    %v406 = vsel %vm374, 1, 0
    %v407 = vsel %vm375, 1, 0
    %v408 = vsel %vm376, 1, 0
    %v409 = vsel %vm377, 1, 0
    %v410 = vsel %vm378, 1, 0
    %v411 = vsel %vm379, 1, 0
    %v412 = vsel %vm380, 1, 0
    %v413 = vsel %vm381, 1, 0
    %v414 = vsel %vm382, 1, 0
    %v415 = vcvt.s32.f32 %v383
    %v416 = vcvt.s32.f32 %v384
    %v417 = vcvt.s32.f32 %v385
    %v418 = vcvt.s32.f32 %v386
    %v419 = vcvt.s32.f32 %v387
    %v420 = vcvt.s32.f32 %v388
    %v421 = vcvt.s32.f32 %v389
    %v422 = vcvt.s32.f32 %v390
    %v423 = vcvt.s32.f32 %v391
    %v424 = vcvt.s32.f32 %v392
    %v425 = vcvt.s32.f32 %v393
    %v426 = vcvt.s32.f32 %v394
    %v427 = vcvt.s32.f32 %v395
    %v428 = vcvt.s32.f32 %v396
    %v429 = vcvt.s32.f32 %v397
    %v430 = vcvt.s32.f32 %v398
    %v431 = vcvt.s32.f32 %v399
    %v432 = vcvt.s32.f32 %v400
    %v433 = vcvt.s32.f32 %v401
    %v434 = vcvt.s32.f32 %v402
    %v435 = vcvt.s32.f32 %v403
    %v436 = vcvt.s32.f32 %v404
    %v437 = vcvt.s32.f32 %v405
    %v438 = vcvt.s32.f32 %v406
    %v439 = vcvt.s32.f32 %v407
    %v440 = vcvt.s32.f32 %v408
    %v441 = vcvt.s32.f32 %v409
    %v442 = vcvt.s32.f32 %v410
    %v443 = vcvt.s32.f32 %v411
    %v444 = vcvt.s32.f32 %v412
    %v445 = vcvt.s32.f32 %v413
    %v446 = vcvt.s32.f32 %v414
    %v447 = vpack.c.bf16 %v416, %v415
    %v448 = vpack.c.bf16 %v418, %v417
    %v449 = vpack.c.bf16 %v420, %v419
    %v450 = vpack.c.bf16 %v422, %v421
    %v451 = vpack.c.bf16 %v424, %v423
    %v452 = vpack.c.bf16 %v426, %v425
    %v453 = vpack.c.bf16 %v428, %v427
    %v454 = vpack.c.bf16 %v430, %v429
    %v455 = vpack.c.bf16 %v432, %v431
    %v456 = vpack.c.bf16 %v434, %v433
    %v457 = vpack.c.bf16 %v436, %v435
    %v458 = vpack.c.bf16 %v438, %v437
    %v459 = vpack.c.bf16 %v440, %v439
    %v460 = vpack.c.bf16 %v442, %v441
    %v461 = vpack.c.bf16 %v444, %v443
    %v462 = vpack.c.bf16 %v446, %v445
    %v463 = vadd.bf16 %v239, %v447
    %v464 = vadd.bf16 %v240, %v448
    %v465 = vadd.bf16 %v241, %v449
    %v466 = vadd.bf16 %v242, %v450
    %v467 = vadd.bf16 %v243, %v451
    %v468 = vadd.bf16 %v244, %v452
    %v469 = vadd.bf16 %v245, %v453
    %v470 = vadd.bf16 %v246, %v454
    %v471 = vadd.bf16 %v247, %v455
    %v472 = vadd.bf16 %v248, %v456
    %v473 = vadd.bf16 %v249, %v457
    %v474 = vadd.bf16 %v250, %v458
    %v475 = vadd.bf16 %v251, %v459
    %v476 = vadd.bf16 %v252, %v460
    %v477 = vadd.bf16 %v253, %v461
    %v478 = vadd.bf16 %v254, %v462
    %479 = vset.pattern.permute.xlu0 2
    %480 = vperm.xlu0 %479, %v13
    %v481 = vpop.permute.xlu0 %480
    %482 = vset.pattern.permute.xlu0 2
    %483 = vperm.xlu0 %482, %v14
    %v484 = vpop.permute.xlu0 %483
    %485 = vset.pattern.permute.xlu0 2
    %486 = vperm.xlu0 %485, %v15
    %v487 = vpop.permute.xlu0 %486
    %488 = vset.pattern.permute.xlu0 2
    %489 = vperm.xlu0 %488, %v16
    %v490 = vpop.permute.xlu0 %489
    %491 = vset.pattern.permute.xlu0 2
    %492 = vperm.xlu0 %491, %v17
    %v493 = vpop.permute.xlu0 %492
    %494 = vset.pattern.permute.xlu0 2
    %495 = vperm.xlu0 %494, %v18
    %v496 = vpop.permute.xlu0 %495
    %497 = vset.pattern.permute.xlu0 2
    %498 = vperm.xlu0 %497, %v19
    %v499 = vpop.permute.xlu0 %498
    %500 = vset.pattern.permute.xlu0 2
    %501 = vperm.xlu0 %500, %v20
    %v502 = vpop.permute.xlu0 %501
    %503 = vset.pattern.permute.xlu0 2
    %504 = vperm.xlu0 %503, %v21
    %v505 = vpop.permute.xlu0 %504
    %506 = vset.pattern.permute.xlu0 2
    %507 = vperm.xlu0 %506, %v22
    %v508 = vpop.permute.xlu0 %507
    %509 = vset.pattern.permute.xlu0 2
    %510 = vperm.xlu0 %509, %v23
    %v511 = vpop.permute.xlu0 %510
    %512 = vset.pattern.permute.xlu0 2
    %513 = vperm.xlu0 %512, %v24
    %v514 = vpop.permute.xlu0 %513
    %515 = vset.pattern.permute.xlu0 2
    %516 = vperm.xlu0 %515, %v25
    %v517 = vpop.permute.xlu0 %516
    %518 = vset.pattern.permute.xlu0 2
    %519 = vperm.xlu0 %518, %v26
    %v520 = vpop.permute.xlu0 %519
    %521 = vset.pattern.permute.xlu0 2
    %522 = vperm.xlu0 %521, %v27
    %v523 = vpop.permute.xlu0 %522
    %524 = vset.pattern.permute.xlu0 2
    %525 = vperm.xlu0 %524, %v28
    %v526 = vpop.permute.xlu0 %525
    %527 = vset.pattern.permute.xlu0 2
    %528 = vperm.xlu0 %527, %v29
    %v529 = vpop.permute.xlu0 %528
    %530 = vset.pattern.permute.xlu0 2
    %531 = vperm.xlu0 %530, %v30
    %v532 = vpop.permute.xlu0 %531
    %533 = vset.pattern.permute.xlu0 2
    %534 = vperm.xlu0 %533, %v31
    %v535 = vpop.permute.xlu0 %534
    %536 = vset.pattern.permute.xlu0 2
    %537 = vperm.xlu0 %536, %v32
    %v538 = vpop.permute.xlu0 %537
    %539 = vset.pattern.permute.xlu0 2
    %540 = vperm.xlu0 %539, %v33
    %v541 = vpop.permute.xlu0 %540
    %542 = vset.pattern.permute.xlu0 2
    %543 = vperm.xlu0 %542, %v34
    %v544 = vpop.permute.xlu0 %543
    %545 = vset.pattern.permute.xlu0 2
    %546 = vperm.xlu0 %545, %v35
    %v547 = vpop.permute.xlu0 %546
    %548 = vset.pattern.permute.xlu0 2
    %549 = vperm.xlu0 %548, %v36
    %v550 = vpop.permute.xlu0 %549
    %551 = vset.pattern.permute.xlu0 2
    %552 = vperm.xlu0 %551, %v37
    %v553 = vpop.permute.xlu0 %552
    %554 = vset.pattern.permute.xlu0 2
    %555 = vperm.xlu0 %554, %v38
    %v556 = vpop.permute.xlu0 %555
    %557 = vset.pattern.permute.xlu0 2
    %558 = vperm.xlu0 %557, %v39
    %v559 = vpop.permute.xlu0 %558
    %560 = vset.pattern.permute.xlu0 2
    %561 = vperm.xlu0 %560, %v40
    %v562 = vpop.permute.xlu0 %561
    %563 = vset.pattern.permute.xlu0 2
    %564 = vperm.xlu0 %563, %v41
    %v565 = vpop.permute.xlu0 %564
    %566 = vset.pattern.permute.xlu0 2
    %567 = vperm.xlu0 %566, %v42
    %v568 = vpop.permute.xlu0 %567
    %569 = vset.pattern.permute.xlu0 2
    %570 = vperm.xlu0 %569, %v43
    %v571 = vpop.permute.xlu0 %570
    %572 = vset.pattern.permute.xlu0 2
    %573 = vperm.xlu0 %572, %v44
    %v574 = vpop.permute.xlu0 %573
    %vm575 = vcmp.eq.s32.totalorder %v46, %v481
    %vm576 = vcmp.eq.s32.totalorder %v46, %v484
    %vm577 = vcmp.eq.s32.totalorder %v46, %v487
    %vm578 = vcmp.eq.s32.totalorder %v46, %v490
    %vm579 = vcmp.eq.s32.totalorder %v46, %v493
    %vm580 = vcmp.eq.s32.totalorder %v46, %v496
    %vm581 = vcmp.eq.s32.totalorder %v46, %v499
    %vm582 = vcmp.eq.s32.totalorder %v46, %v502
    %vm583 = vcmp.eq.s32.totalorder %v46, %v505
    %vm584 = vcmp.eq.s32.totalorder %v46, %v508
    %vm585 = vcmp.eq.s32.totalorder %v46, %v511
    %vm586 = vcmp.eq.s32.totalorder %v46, %v514
    %vm587 = vcmp.eq.s32.totalorder %v46, %v517
    %vm588 = vcmp.eq.s32.totalorder %v46, %v520
    %vm589 = vcmp.eq.s32.totalorder %v46, %v523
    %vm590 = vcmp.eq.s32.totalorder %v46, %v526
    %vm591 = vcmp.eq.s32.totalorder %v46, %v529
    %vm592 = vcmp.eq.s32.totalorder %v46, %v532
    %vm593 = vcmp.eq.s32.totalorder %v46, %v535
    %vm594 = vcmp.eq.s32.totalorder %v46, %v538
    %vm595 = vcmp.eq.s32.totalorder %v46, %v541
    %vm596 = vcmp.eq.s32.totalorder %v46, %v544
    %vm597 = vcmp.eq.s32.totalorder %v46, %v547
    %vm598 = vcmp.eq.s32.totalorder %v46, %v550
    %vm599 = vcmp.eq.s32.totalorder %v46, %v553
    %vm600 = vcmp.eq.s32.totalorder %v46, %v556
    %vm601 = vcmp.eq.s32.totalorder %v46, %v559
    %vm602 = vcmp.eq.s32.totalorder %v46, %v562
    %vm603 = vcmp.eq.s32.totalorder %v46, %v565
    %vm604 = vcmp.eq.s32.totalorder %v46, %v568
    %vm605 = vcmp.eq.s32.totalorder %v46, %v571
    %vm606 = vcmp.eq.s32.totalorder %v46, %v574
    %v607 = vsel %vm575, 1, 0
    %v608 = vsel %vm576, 1, 0
    %v609 = vsel %vm577, 1, 0
    %v610 = vsel %vm578, 1, 0
    %v611 = vsel %vm579, 1, 0
    %v612 = vsel %vm580, 1, 0
    %v613 = vsel %vm581, 1, 0
    %v614 = vsel %vm582, 1, 0
    %v615 = vsel %vm583, 1, 0
    %v616 = vsel %vm584, 1, 0
    %v617 = vsel %vm585, 1, 0
    %v618 = vsel %vm586, 1, 0
    %v619 = vsel %vm587, 1, 0
    %v620 = vsel %vm588, 1, 0
    %v621 = vsel %vm589, 1, 0
    %v622 = vsel %vm590, 1, 0
    %v623 = vsel %vm591, 1, 0
    %v624 = vsel %vm592, 1, 0
    %v625 = vsel %vm593, 1, 0
    %v626 = vsel %vm594, 1, 0
    %v627 = vsel %vm595, 1, 0
    %v628 = vsel %vm596, 1, 0
    %v629 = vsel %vm597, 1, 0
    %v630 = vsel %vm598, 1, 0
    %v631 = vsel %vm599, 1, 0
    %v632 = vsel %vm600, 1, 0
    %v633 = vsel %vm601, 1, 0
    %v634 = vsel %vm602, 1, 0
    %v635 = vsel %vm603, 1, 0
    %v636 = vsel %vm604, 1, 0
    %v637 = vsel %vm605, 1, 0
    %v638 = vsel %vm606, 1, 0
    %v639 = vcvt.s32.f32 %v607
    %v640 = vcvt.s32.f32 %v608
    %v641 = vcvt.s32.f32 %v609
    %v642 = vcvt.s32.f32 %v610
    %v643 = vcvt.s32.f32 %v611
    %v644 = vcvt.s32.f32 %v612
    %v645 = vcvt.s32.f32 %v613
    %v646 = vcvt.s32.f32 %v614
    %v647 = vcvt.s32.f32 %v615
    %v648 = vcvt.s32.f32 %v616
    %v649 = vcvt.s32.f32 %v617
    %v650 = vcvt.s32.f32 %v618
    %v651 = vcvt.s32.f32 %v619
    %v652 = vcvt.s32.f32 %v620
    %v653 = vcvt.s32.f32 %v621
    %v654 = vcvt.s32.f32 %v622
    %v655 = vcvt.s32.f32 %v623
    %v656 = vcvt.s32.f32 %v624
    %v657 = vcvt.s32.f32 %v625
    %v658 = vcvt.s32.f32 %v626
    %v659 = vcvt.s32.f32 %v627
    %v660 = vcvt.s32.f32 %v628
    %v661 = vcvt.s32.f32 %v629
    %v662 = vcvt.s32.f32 %v630
    %v663 = vcvt.s32.f32 %v631
    %v664 = vcvt.s32.f32 %v632
    %v665 = vcvt.s32.f32 %v633
    %v666 = vcvt.s32.f32 %v634
    %v667 = vcvt.s32.f32 %v635
    %v668 = vcvt.s32.f32 %v636
    %v669 = vcvt.s32.f32 %v637
    %v670 = vcvt.s32.f32 %v638
    %v671 = vpack.c.bf16 %v640, %v639
    %v672 = vpack.c.bf16 %v642, %v641
    %v673 = vpack.c.bf16 %v644, %v643
    %v674 = vpack.c.bf16 %v646, %v645
    %v675 = vpack.c.bf16 %v648, %v647
    %v676 = vpack.c.bf16 %v650, %v649
    %v677 = vpack.c.bf16 %v652, %v651
    %v678 = vpack.c.bf16 %v654, %v653
    %v679 = vpack.c.bf16 %v656, %v655
    %v680 = vpack.c.bf16 %v658, %v657
    %v681 = vpack.c.bf16 %v660, %v659
    %v682 = vpack.c.bf16 %v662, %v661
    %v683 = vpack.c.bf16 %v664, %v663
    %v684 = vpack.c.bf16 %v666, %v665
    %v685 = vpack.c.bf16 %v668, %v667
    %v686 = vpack.c.bf16 %v670, %v669
    %v687 = vadd.bf16 %v463, %v671
    %v688 = vadd.bf16 %v464, %v672
    %v689 = vadd.bf16 %v465, %v673
    %v690 = vadd.bf16 %v466, %v674
    %v691 = vadd.bf16 %v467, %v675
    %v692 = vadd.bf16 %v468, %v676
    %v693 = vadd.bf16 %v469, %v677
    %v694 = vadd.bf16 %v470, %v678
    %v695 = vadd.bf16 %v471, %v679
    %v696 = vadd.bf16 %v472, %v680
    %v697 = vadd.bf16 %v473, %v681
    %v698 = vadd.bf16 %v474, %v682
    %v699 = vadd.bf16 %v475, %v683
    %v700 = vadd.bf16 %v476, %v684
    %v701 = vadd.bf16 %v477, %v685
    %v702 = vadd.bf16 %v478, %v686
    %703 = vset.pattern.permute.xlu0 3
    %704 = vperm.xlu0 %703, %v13
    %v705 = vpop.permute.xlu0 %704
    %706 = vset.pattern.permute.xlu0 3
    %707 = vperm.xlu0 %706, %v14
    %v708 = vpop.permute.xlu0 %707
    %709 = vset.pattern.permute.xlu0 3
    %710 = vperm.xlu0 %709, %v15
    %v711 = vpop.permute.xlu0 %710
    %712 = vset.pattern.permute.xlu0 3
    %713 = vperm.xlu0 %712, %v16
    %v714 = vpop.permute.xlu0 %713
    %715 = vset.pattern.permute.xlu0 3
    %716 = vperm.xlu0 %715, %v17
    %v717 = vpop.permute.xlu0 %716
    %718 = vset.pattern.permute.xlu0 3
    %719 = vperm.xlu0 %718, %v18
    %v720 = vpop.permute.xlu0 %719
    %721 = vset.pattern.permute.xlu0 3
    %722 = vperm.xlu0 %721, %v19
    %v723 = vpop.permute.xlu0 %722
    %724 = vset.pattern.permute.xlu0 3
    %725 = vperm.xlu0 %724, %v20
    %v726 = vpop.permute.xlu0 %725
    %727 = vset.pattern.permute.xlu0 3
    %728 = vperm.xlu0 %727, %v21
    %v729 = vpop.permute.xlu0 %728
    %730 = vset.pattern.permute.xlu0 3
    %731 = vperm.xlu0 %730, %v22
    %v732 = vpop.permute.xlu0 %731
    %733 = vset.pattern.permute.xlu0 3
    %734 = vperm.xlu0 %733, %v23
    %v735 = vpop.permute.xlu0 %734
    %736 = vset.pattern.permute.xlu0 3
    %737 = vperm.xlu0 %736, %v24
    %v738 = vpop.permute.xlu0 %737
    %739 = vset.pattern.permute.xlu0 3
    %740 = vperm.xlu0 %739, %v25
    %v741 = vpop.permute.xlu0 %740
    %742 = vset.pattern.permute.xlu0 3
    %743 = vperm.xlu0 %742, %v26
    %v744 = vpop.permute.xlu0 %743
    %745 = vset.pattern.permute.xlu0 3
    %746 = vperm.xlu0 %745, %v27
    %v747 = vpop.permute.xlu0 %746
    %748 = vset.pattern.permute.xlu0 3
    %749 = vperm.xlu0 %748, %v28
    %v750 = vpop.permute.xlu0 %749
    %751 = vset.pattern.permute.xlu0 3
    %752 = vperm.xlu0 %751, %v29
    %v753 = vpop.permute.xlu0 %752
    %754 = vset.pattern.permute.xlu0 3
    %755 = vperm.xlu0 %754, %v30
    %v756 = vpop.permute.xlu0 %755
    %757 = vset.pattern.permute.xlu0 3
    %758 = vperm.xlu0 %757, %v31
    %v759 = vpop.permute.xlu0 %758
    %760 = vset.pattern.permute.xlu0 3
    %761 = vperm.xlu0 %760, %v32
    %v762 = vpop.permute.xlu0 %761
    %763 = vset.pattern.permute.xlu0 3
    %764 = vperm.xlu0 %763, %v33
    %v765 = vpop.permute.xlu0 %764
    %766 = vset.pattern.permute.xlu0 3
    %767 = vperm.xlu0 %766, %v34
    %v768 = vpop.permute.xlu0 %767
    %769 = vset.pattern.permute.xlu0 3
    %770 = vperm.xlu0 %769, %v35
    %v771 = vpop.permute.xlu0 %770
    %772 = vset.pattern.permute.xlu0 3
    %773 = vperm.xlu0 %772, %v36
    %v774 = vpop.permute.xlu0 %773
    %775 = vset.pattern.permute.xlu0 3
    %776 = vperm.xlu0 %775, %v37
    %v777 = vpop.permute.xlu0 %776
    %778 = vset.pattern.permute.xlu0 3
    %779 = vperm.xlu0 %778, %v38
    %v780 = vpop.permute.xlu0 %779
    %781 = vset.pattern.permute.xlu0 3
    %782 = vperm.xlu0 %781, %v39
    %v783 = vpop.permute.xlu0 %782
    %784 = vset.pattern.permute.xlu0 3
    %785 = vperm.xlu0 %784, %v40
    %v786 = vpop.permute.xlu0 %785
    %787 = vset.pattern.permute.xlu0 3
    %788 = vperm.xlu0 %787, %v41
    %v789 = vpop.permute.xlu0 %788
    %790 = vset.pattern.permute.xlu0 3
    %791 = vperm.xlu0 %790, %v42
    %v792 = vpop.permute.xlu0 %791
    %793 = vset.pattern.permute.xlu0 3
    %794 = vperm.xlu0 %793, %v43
    %v795 = vpop.permute.xlu0 %794
    %796 = vset.pattern.permute.xlu0 3
    %797 = vperm.xlu0 %796, %v44
    %v798 = vpop.permute.xlu0 %797
    %vm799 = vcmp.eq.s32.totalorder %v46, %v705
    %vm800 = vcmp.eq.s32.totalorder %v46, %v708
    %vm801 = vcmp.eq.s32.totalorder %v46, %v711
    %vm802 = vcmp.eq.s32.totalorder %v46, %v714
    %vm803 = vcmp.eq.s32.totalorder %v46, %v717
    %vm804 = vcmp.eq.s32.totalorder %v46, %v720
    %vm805 = vcmp.eq.s32.totalorder %v46, %v723
    %vm806 = vcmp.eq.s32.totalorder %v46, %v726
    %vm807 = vcmp.eq.s32.totalorder %v46, %v729
    %vm808 = vcmp.eq.s32.totalorder %v46, %v732
    %vm809 = vcmp.eq.s32.totalorder %v46, %v735
    %vm810 = vcmp.eq.s32.totalorder %v46, %v738
    %vm811 = vcmp.eq.s32.totalorder %v46, %v741
    %vm812 = vcmp.eq.s32.totalorder %v46, %v744
    %vm813 = vcmp.eq.s32.totalorder %v46, %v747
    %vm814 = vcmp.eq.s32.totalorder %v46, %v750
    %vm815 = vcmp.eq.s32.totalorder %v46, %v753
    %vm816 = vcmp.eq.s32.totalorder %v46, %v756
    %vm817 = vcmp.eq.s32.totalorder %v46, %v759
    %vm818 = vcmp.eq.s32.totalorder %v46, %v762
    %vm819 = vcmp.eq.s32.totalorder %v46, %v765
    %vm820 = vcmp.eq.s32.totalorder %v46, %v768
    %vm821 = vcmp.eq.s32.totalorder %v46, %v771
    %vm822 = vcmp.eq.s32.totalorder %v46, %v774
    %vm823 = vcmp.eq.s32.totalorder %v46, %v777
    %vm824 = vcmp.eq.s32.totalorder %v46, %v780
    %vm825 = vcmp.eq.s32.totalorder %v46, %v783
    %vm826 = vcmp.eq.s32.totalorder %v46, %v786
    %vm827 = vcmp.eq.s32.totalorder %v46, %v789
    %vm828 = vcmp.eq.s32.totalorder %v46, %v792
    %vm829 = vcmp.eq.s32.totalorder %v46, %v795
    %vm830 = vcmp.eq.s32.totalorder %v46, %v798
    %v831 = vsel %vm799, 1, 0
    %v832 = vsel %vm800, 1, 0
    %v833 = vsel %vm801, 1, 0
    %v834 = vsel %vm802, 1, 0
    %v835 = vsel %vm803, 1, 0
    %v836 = vsel %vm804, 1, 0
    %v837 = vsel %vm805, 1, 0
    %v838 = vsel %vm806, 1, 0
    %v839 = vsel %vm807, 1, 0
    %v840 = vsel %vm808, 1, 0
    %v841 = vsel %vm809, 1, 0
    %v842 = vsel %vm810, 1, 0
    %v843 = vsel %vm811, 1, 0
    %v844 = vsel %vm812, 1, 0
    %v845 = vsel %vm813, 1, 0
    %v846 = vsel %vm814, 1, 0
    %v847 = vsel %vm815, 1, 0
    %v848 = vsel %vm816, 1, 0
    %v849 = vsel %vm817, 1, 0
    %v850 = vsel %vm818, 1, 0
    %v851 = vsel %vm819, 1, 0
    %v852 = vsel %vm820, 1, 0
    %v853 = vsel %vm821, 1, 0
    %v854 = vsel %vm822, 1, 0
    %v855 = vsel %vm823, 1, 0
    %v856 = vsel %vm824, 1, 0
    %v857 = vsel %vm825, 1, 0
    %v858 = vsel %vm826, 1, 0
    %v859 = vsel %vm827, 1, 0
    %v860 = vsel %vm828, 1, 0
    %v861 = vsel %vm829, 1, 0
    %v862 = vsel %vm830, 1, 0
    %v863 = vcvt.s32.f32 %v831
    %v864 = vcvt.s32.f32 %v832
    %v865 = vcvt.s32.f32 %v833
    %v866 = vcvt.s32.f32 %v834
    %v867 = vcvt.s32.f32 %v835
    %v868 = vcvt.s32.f32 %v836
    %v869 = vcvt.s32.f32 %v837
    %v870 = vcvt.s32.f32 %v838
    %v871 = vcvt.s32.f32 %v839
    %v872 = vcvt.s32.f32 %v840
    %v873 = vcvt.s32.f32 %v841
    %v874 = vcvt.s32.f32 %v842
    %v875 = vcvt.s32.f32 %v843
    %v876 = vcvt.s32.f32 %v844
    %v877 = vcvt.s32.f32 %v845
    %v878 = vcvt.s32.f32 %v846
    %v879 = vcvt.s32.f32 %v847
    %v880 = vcvt.s32.f32 %v848
    %v881 = vcvt.s32.f32 %v849
    %v882 = vcvt.s32.f32 %v850
    %v883 = vcvt.s32.f32 %v851
    %v884 = vcvt.s32.f32 %v852
    %v885 = vcvt.s32.f32 %v853
    %v886 = vcvt.s32.f32 %v854
    %v887 = vcvt.s32.f32 %v855
    %v888 = vcvt.s32.f32 %v856
    %v889 = vcvt.s32.f32 %v857
    %v890 = vcvt.s32.f32 %v858
    %v891 = vcvt.s32.f32 %v859
    %v892 = vcvt.s32.f32 %v860
    %v893 = vcvt.s32.f32 %v861
    %v894 = vcvt.s32.f32 %v862
    %v895 = vpack.c.bf16 %v864, %v863
    %v896 = vpack.c.bf16 %v866, %v865
    %v897 = vpack.c.bf16 %v868, %v867
    %v898 = vpack.c.bf16 %v870, %v869
    %v899 = vpack.c.bf16 %v872, %v871
    %v900 = vpack.c.bf16 %v874, %v873
    %v901 = vpack.c.bf16 %v876, %v875
    %v902 = vpack.c.bf16 %v878, %v877
    %v903 = vpack.c.bf16 %v880, %v879
    %v904 = vpack.c.bf16 %v882, %v881
    %v905 = vpack.c.bf16 %v884, %v883
    %v906 = vpack.c.bf16 %v886, %v885
    %v907 = vpack.c.bf16 %v888, %v887
    %v908 = vpack.c.bf16 %v890, %v889
    %v909 = vpack.c.bf16 %v892, %v891
    %v910 = vpack.c.bf16 %v894, %v893
    %v911 = vadd.bf16 %v687, %v895
    %v912 = vadd.bf16 %v688, %v896
    %v913 = vadd.bf16 %v689, %v897
    %v914 = vadd.bf16 %v690, %v898
    %v915 = vadd.bf16 %v691, %v899
    %v916 = vadd.bf16 %v692, %v900
    %v917 = vadd.bf16 %v693, %v901
    %v918 = vadd.bf16 %v694, %v902
    %v919 = vadd.bf16 %v695, %v903
    %v920 = vadd.bf16 %v696, %v904
    %v921 = vadd.bf16 %v697, %v905
    %v922 = vadd.bf16 %v698, %v906
    %v923 = vadd.bf16 %v699, %v907
    %v924 = vadd.bf16 %v700, %v908
    %v925 = vadd.bf16 %v701, %v909
    %v926 = vadd.bf16 %v702, %v910
    %927 = vset.pattern.permute.xlu0 4
    %928 = vperm.xlu0 %927, %v13
    %v929 = vpop.permute.xlu0 %928
    %930 = vset.pattern.permute.xlu0 4
    %931 = vperm.xlu0 %930, %v14
    %v932 = vpop.permute.xlu0 %931
    %933 = vset.pattern.permute.xlu0 4
    %934 = vperm.xlu0 %933, %v15
    %v935 = vpop.permute.xlu0 %934
    %936 = vset.pattern.permute.xlu0 4
    %937 = vperm.xlu0 %936, %v16
    %v938 = vpop.permute.xlu0 %937
    %939 = vset.pattern.permute.xlu0 4
    %940 = vperm.xlu0 %939, %v17
    %v941 = vpop.permute.xlu0 %940
    %942 = vset.pattern.permute.xlu0 4
    %943 = vperm.xlu0 %942, %v18
    %v944 = vpop.permute.xlu0 %943
    %945 = vset.pattern.permute.xlu0 4
    %946 = vperm.xlu0 %945, %v19
    %v947 = vpop.permute.xlu0 %946
    %948 = vset.pattern.permute.xlu0 4
    %949 = vperm.xlu0 %948, %v20
    %v950 = vpop.permute.xlu0 %949
    %951 = vset.pattern.permute.xlu0 4
    %952 = vperm.xlu0 %951, %v21
    %v953 = vpop.permute.xlu0 %952
    %954 = vset.pattern.permute.xlu0 4
    %955 = vperm.xlu0 %954, %v22
    %v956 = vpop.permute.xlu0 %955
    %957 = vset.pattern.permute.xlu0 4
    %958 = vperm.xlu0 %957, %v23
    %v959 = vpop.permute.xlu0 %958
    %960 = vset.pattern.permute.xlu0 4
    %961 = vperm.xlu0 %960, %v24
    %v962 = vpop.permute.xlu0 %961
    %963 = vset.pattern.permute.xlu0 4
    %964 = vperm.xlu0 %963, %v25
    %v965 = vpop.permute.xlu0 %964
    %966 = vset.pattern.permute.xlu0 4
    %967 = vperm.xlu0 %966, %v26
    %v968 = vpop.permute.xlu0 %967
    %969 = vset.pattern.permute.xlu0 4
    %970 = vperm.xlu0 %969, %v27
    %v971 = vpop.permute.xlu0 %970
    %972 = vset.pattern.permute.xlu0 4
    %973 = vperm.xlu0 %972, %v28
    %v974 = vpop.permute.xlu0 %973
    %975 = vset.pattern.permute.xlu0 4
    %976 = vperm.xlu0 %975, %v29
    %v977 = vpop.permute.xlu0 %976
    %978 = vset.pattern.permute.xlu0 4
    %979 = vperm.xlu0 %978, %v30
    %v980 = vpop.permute.xlu0 %979
    %981 = vset.pattern.permute.xlu0 4
    %982 = vperm.xlu0 %981, %v31
    %v983 = vpop.permute.xlu0 %982
    %984 = vset.pattern.permute.xlu0 4
    %985 = vperm.xlu0 %984, %v32
    %v986 = vpop.permute.xlu0 %985
    %987 = vset.pattern.permute.xlu0 4
    %988 = vperm.xlu0 %987, %v33
    %v989 = vpop.permute.xlu0 %988
    %990 = vset.pattern.permute.xlu0 4
    %991 = vperm.xlu0 %990, %v34
    %v992 = vpop.permute.xlu0 %991
    %993 = vset.pattern.permute.xlu0 4
    %994 = vperm.xlu0 %993, %v35
    %v995 = vpop.permute.xlu0 %994
    %996 = vset.pattern.permute.xlu0 4
    %997 = vperm.xlu0 %996, %v36
    %v998 = vpop.permute.xlu0 %997
    %999 = vset.pattern.permute.xlu0 4
    %1000 = vperm.xlu0 %999, %v37
    %v1001 = vpop.permute.xlu0 %1000
    %1002 = vset.pattern.permute.xlu0 4
    %1003 = vperm.xlu0 %1002, %v38
    %v1004 = vpop.permute.xlu0 %1003
    %1005 = vset.pattern.permute.xlu0 4
    %1006 = vperm.xlu0 %1005, %v39
    %v1007 = vpop.permute.xlu0 %1006
    %1008 = vset.pattern.permute.xlu0 4
    %1009 = vperm.xlu0 %1008, %v40
    %v1010 = vpop.permute.xlu0 %1009
    %1011 = vset.pattern.permute.xlu0 4
    %1012 = vperm.xlu0 %1011, %v41
    %v1013 = vpop.permute.xlu0 %1012
    %1014 = vset.pattern.permute.xlu0 4
    %1015 = vperm.xlu0 %1014, %v42
    %v1016 = vpop.permute.xlu0 %1015
    %1017 = vset.pattern.permute.xlu0 4
    %1018 = vperm.xlu0 %1017, %v43
    %v1019 = vpop.permute.xlu0 %1018
    %1020 = vset.pattern.permute.xlu0 4
    %1021 = vperm.xlu0 %1020, %v44
    %v1022 = vpop.permute.xlu0 %1021
    %vm1023 = vcmp.eq.s32.totalorder %v46, %v929
    %vm1024 = vcmp.eq.s32.totalorder %v46, %v932
    %vm1025 = vcmp.eq.s32.totalorder %v46, %v935
    %vm1026 = vcmp.eq.s32.totalorder %v46, %v938
    %vm1027 = vcmp.eq.s32.totalorder %v46, %v941
    %vm1028 = vcmp.eq.s32.totalorder %v46, %v944
    %vm1029 = vcmp.eq.s32.totalorder %v46, %v947
    %vm1030 = vcmp.eq.s32.totalorder %v46, %v950
    %vm1031 = vcmp.eq.s32.totalorder %v46, %v953
    %vm1032 = vcmp.eq.s32.totalorder %v46, %v956
    %vm1033 = vcmp.eq.s32.totalorder %v46, %v959
    %vm1034 = vcmp.eq.s32.totalorder %v46, %v962
    %vm1035 = vcmp.eq.s32.totalorder %v46, %v965
    %vm1036 = vcmp.eq.s32.totalorder %v46, %v968
    %vm1037 = vcmp.eq.s32.totalorder %v46, %v971
    %vm1038 = vcmp.eq.s32.totalorder %v46, %v974
    %vm1039 = vcmp.eq.s32.totalorder %v46, %v977
    %vm1040 = vcmp.eq.s32.totalorder %v46, %v980
    %vm1041 = vcmp.eq.s32.totalorder %v46, %v983
    %vm1042 = vcmp.eq.s32.totalorder %v46, %v986
    %vm1043 = vcmp.eq.s32.totalorder %v46, %v989
    %vm1044 = vcmp.eq.s32.totalorder %v46, %v992
    %vm1045 = vcmp.eq.s32.totalorder %v46, %v995
    %vm1046 = vcmp.eq.s32.totalorder %v46, %v998
    %vm1047 = vcmp.eq.s32.totalorder %v46, %v1001
    %vm1048 = vcmp.eq.s32.totalorder %v46, %v1004
    %vm1049 = vcmp.eq.s32.totalorder %v46, %v1007
    %vm1050 = vcmp.eq.s32.totalorder %v46, %v1010
    %vm1051 = vcmp.eq.s32.totalorder %v46, %v1013
    %vm1052 = vcmp.eq.s32.totalorder %v46, %v1016
    %vm1053 = vcmp.eq.s32.totalorder %v46, %v1019
    %vm1054 = vcmp.eq.s32.totalorder %v46, %v1022
    %v1055 = vsel %vm1023, 1, 0
    %v1056 = vsel %vm1024, 1, 0
    %v1057 = vsel %vm1025, 1, 0
    %v1058 = vsel %vm1026, 1, 0
    %v1059 = vsel %vm1027, 1, 0
    %v1060 = vsel %vm1028, 1, 0
    %v1061 = vsel %vm1029, 1, 0
    %v1062 = vsel %vm1030, 1, 0
    %v1063 = vsel %vm1031, 1, 0
    %v1064 = vsel %vm1032, 1, 0
    %v1065 = vsel %vm1033, 1, 0
    %v1066 = vsel %vm1034, 1, 0
    %v1067 = vsel %vm1035, 1, 0
    %v1068 = vsel %vm1036, 1, 0
    %v1069 = vsel %vm1037, 1, 0
    %v1070 = vsel %vm1038, 1, 0
    %v1071 = vsel %vm1039, 1, 0
    %v1072 = vsel %vm1040, 1, 0
    %v1073 = vsel %vm1041, 1, 0
    %v1074 = vsel %vm1042, 1, 0
    %v1075 = vsel %vm1043, 1, 0
    %v1076 = vsel %vm1044, 1, 0
    %v1077 = vsel %vm1045, 1, 0
    %v1078 = vsel %vm1046, 1, 0
    %v1079 = vsel %vm1047, 1, 0
    %v1080 = vsel %vm1048, 1, 0
    %v1081 = vsel %vm1049, 1, 0
    %v1082 = vsel %vm1050, 1, 0
    %v1083 = vsel %vm1051, 1, 0
    %v1084 = vsel %vm1052, 1, 0
    %v1085 = vsel %vm1053, 1, 0
    %v1086 = vsel %vm1054, 1, 0
    %v1087 = vcvt.s32.f32 %v1055
    %v1088 = vcvt.s32.f32 %v1056
    %v1089 = vcvt.s32.f32 %v1057
    %v1090 = vcvt.s32.f32 %v1058
    %v1091 = vcvt.s32.f32 %v1059
    %v1092 = vcvt.s32.f32 %v1060
    %v1093 = vcvt.s32.f32 %v1061
    %v1094 = vcvt.s32.f32 %v1062
    %v1095 = vcvt.s32.f32 %v1063
    %v1096 = vcvt.s32.f32 %v1064
    %v1097 = vcvt.s32.f32 %v1065
    %v1098 = vcvt.s32.f32 %v1066
    %v1099 = vcvt.s32.f32 %v1067
    %v1100 = vcvt.s32.f32 %v1068
    %v1101 = vcvt.s32.f32 %v1069
    %v1102 = vcvt.s32.f32 %v1070
    %v1103 = vcvt.s32.f32 %v1071
    %v1104 = vcvt.s32.f32 %v1072
    %v1105 = vcvt.s32.f32 %v1073
    %v1106 = vcvt.s32.f32 %v1074
    %v1107 = vcvt.s32.f32 %v1075
    %v1108 = vcvt.s32.f32 %v1076
    %v1109 = vcvt.s32.f32 %v1077
    %v1110 = vcvt.s32.f32 %v1078
    %v1111 = vcvt.s32.f32 %v1079
    %v1112 = vcvt.s32.f32 %v1080
    %v1113 = vcvt.s32.f32 %v1081
    %v1114 = vcvt.s32.f32 %v1082
    %v1115 = vcvt.s32.f32 %v1083
    %v1116 = vcvt.s32.f32 %v1084
    %v1117 = vcvt.s32.f32 %v1085
    %v1118 = vcvt.s32.f32 %v1086
    %v1119 = vpack.c.bf16 %v1088, %v1087
    %v1120 = vpack.c.bf16 %v1090, %v1089
    %v1121 = vpack.c.bf16 %v1092, %v1091
    %v1122 = vpack.c.bf16 %v1094, %v1093
    %v1123 = vpack.c.bf16 %v1096, %v1095
    %v1124 = vpack.c.bf16 %v1098, %v1097
    %v1125 = vpack.c.bf16 %v1100, %v1099
    %v1126 = vpack.c.bf16 %v1102, %v1101
    %v1127 = vpack.c.bf16 %v1104, %v1103
    %v1128 = vpack.c.bf16 %v1106, %v1105
    %v1129 = vpack.c.bf16 %v1108, %v1107
    %v1130 = vpack.c.bf16 %v1110, %v1109
    %v1131 = vpack.c.bf16 %v1112, %v1111
    %v1132 = vpack.c.bf16 %v1114, %v1113
    %v1133 = vpack.c.bf16 %v1116, %v1115
    %v1134 = vpack.c.bf16 %v1118, %v1117
    %v1135 = vadd.bf16 %v911, %v1119
    %v1136 = vadd.bf16 %v912, %v1120
    %v1137 = vadd.bf16 %v913, %v1121
    %v1138 = vadd.bf16 %v914, %v1122
    %v1139 = vadd.bf16 %v915, %v1123
    %v1140 = vadd.bf16 %v916, %v1124
    %v1141 = vadd.bf16 %v917, %v1125
    %v1142 = vadd.bf16 %v918, %v1126
    %v1143 = vadd.bf16 %v919, %v1127
    %v1144 = vadd.bf16 %v920, %v1128
    %v1145 = vadd.bf16 %v921, %v1129
    %v1146 = vadd.bf16 %v922, %v1130
    %v1147 = vadd.bf16 %v923, %v1131
    %v1148 = vadd.bf16 %v924, %v1132
    %v1149 = vadd.bf16 %v925, %v1133
    %v1150 = vadd.bf16 %v926, %v1134
    %v1151 = vld [vmem:[%s1] sm:$0xf]
    %v1152 = vld [vmem:[%s1 + $0x4] sm:$0xf]
    %v1153 = vld [vmem:[%s1 + $0x8] sm:$0xf]
    %v1154 = vld [vmem:[%s1 + $0xc] sm:$0xf]
    %v1155 = vld [vmem:[%s1 + $0x10] sm:$0xf]
    %v1156 = vld [vmem:[%s1 + $0x14] sm:$0xf]
    %v1157 = vld [vmem:[%s1 + $0x18] sm:$0xf]
    %v1158 = vld [vmem:[%s1 + $0x1c] sm:$0xf]
    %v1159 = vld [vmem:[%s1 + $0x20] sm:$0xf]
    %v1160 = vld [vmem:[%s1 + $0x24] sm:$0xf]
    %v1161 = vld [vmem:[%s1 + $0x28] sm:$0xf]
    %v1162 = vld [vmem:[%s1 + $0x2c] sm:$0xf]
    %v1163 = vld [vmem:[%s1 + $0x30] sm:$0xf]
    %v1164 = vld [vmem:[%s1 + $0x34] sm:$0xf]
    %v1165 = vld [vmem:[%s1 + $0x38] sm:$0xf]
    %v1166 = vld [vmem:[%s1 + $0x3c] sm:$0xf]
    %v1183 = vunpack.c.l.b16 %v1151
    %v1184 = vunpack.c.l.b16 %v1152
    %v1185 = vunpack.c.l.b16 %v1153
    %v1186 = vunpack.c.l.b16 %v1154
    %v1187 = vunpack.c.l.b16 %v1155
    %v1188 = vunpack.c.l.b16 %v1156
    %v1189 = vunpack.c.l.b16 %v1157
    %v1190 = vunpack.c.l.b16 %v1158
    %v1191 = vunpack.c.l.b16 %v1159
    %v1192 = vunpack.c.l.b16 %v1160
    %v1193 = vunpack.c.l.b16 %v1161
    %v1194 = vunpack.c.l.b16 %v1162
    %v1195 = vunpack.c.l.b16 %v1163
    %v1196 = vunpack.c.l.b16 %v1164
    %v1197 = vunpack.c.l.b16 %v1165
    %v1198 = vunpack.c.l.b16 %v1166
    %v1199 = vpack.c.b16 %v1184, %v1183
    %v1200 = vpack.c.b16 %v1186, %v1185
    %v1201 = vpack.c.b16 %v1188, %v1187
    %v1202 = vpack.c.b16 %v1190, %v1189
    %v1203 = vpack.c.b16 %v1192, %v1191
    %v1204 = vpack.c.b16 %v1194, %v1193
    %v1205 = vpack.c.b16 %v1196, %v1195
    %v1206 = vpack.c.b16 %v1198, %v1197
    %1215 = vmatprep.subr.bf16.mxu0 0
    %1216 = vmatpush1.bf16.msra.mxu0 %v1199
    %1217 = vmatprep.subr.bf16.mxu0 0
    %1218 = vmatpush1.bf16.msra.mxu0 %v1200
    %1219 = vmatprep.subr.bf16.mxu0 0
    %1220 = vmatpush1.bf16.msra.mxu0 %v1201
    %1221 = vmatprep.subr.bf16.mxu0 0
    %1222 = vmatpush1.bf16.msra.mxu0 %v1202
    %1223 = vmatprep.subr.bf16.mxu0 0
    %1224 = vmatpush1.bf16.msra.mxu0 %v1203
    %1225 = vmatprep.subr.bf16.mxu0 0
    %1226 = vmatpush1.bf16.msra.mxu0 %v1204
    %1227 = vmatprep.subr.bf16.mxu0 0
    %1228 = vmatpush1.bf16.msra.mxu0 %v1205
    %1229 = vmatprep.subr.bf16.mxu0 0
    %1230 = vmatpush1.bf16.msra.mxu0 %v1206
    %1231 = vmatprep.subr.bf16.mxu0 0
    %1232 = vmatpush1.bf16.msra.mxu0 0
    %1233 = vmatprep.subr.bf16.mxu0 0
    %1234 = vmatpush1.bf16.msra.mxu0 0
    %1235 = vmatprep.subr.bf16.mxu0 0
    %1236 = vmatpush1.bf16.msra.mxu0 0
    %1237 = vmatprep.subr.bf16.mxu0 0
    %1238 = vmatpush1.bf16.msra.mxu0 0
    %1239 = vmatprep.subr.bf16.mxu0 0
    %1240 = vmatpush1.bf16.msra.mxu0 0
    %1241 = vmatprep.subr.bf16.mxu0 0
    %1242 = vmatpush1.bf16.msra.mxu0 0
    %1243 = vmatprep.subr.bf16.mxu0 0
    %1244 = vmatpush1.bf16.msra.mxu0 0
    %1245 = vmatprep.subr.bf16.mxu0 0
    %1246 = vmatpush1.bf16.msra.mxu0 0
    %1247 = vmatprep.mubr.bf16.mxu0 0
    %1248 = vmatmul.mubr.bf16.gmra.mrb[0].mxu0 %v1135
    %v1249 = vpop.f32.mrb[0].mxu0
    %v1250 = vadd.f32 0.0, %v1249
    %v1251 = vpop.f32.mrb[0].mxu0
    %v1252 = vpop.f32.mrb[0].mxu0
    %v1253 = vadd.f32 0.0, %v1252
    %v1254 = vpop.f32.mrb[0].mxu0
    %1255 = vmatprep.mubr.bf16.mxu0 0
    %1256 = vmatmul.mubr.bf16.gmra.mrb[0].mxu0 %v1136
    %v1257 = vpop.f32.mrb[0].mxu0
    %v1258 = vadd.f32 0.0, %v1257
    %v1259 = vpop.f32.mrb[0].mxu0
    %v1260 = vpop.f32.mrb[0].mxu0
    %v1261 = vadd.f32 0.0, %v1260
    %v1262 = vpop.f32.mrb[0].mxu0
    %1263 = vmatprep.mubr.bf16.mxu0 0
    %1264 = vmatmul.mubr.bf16.gmra.mrb[0].mxu0 %v1137
    %v1265 = vpop.f32.mrb[0].mxu0
    %v1266 = vadd.f32 0.0, %v1265
    %v1267 = vpop.f32.mrb[0].mxu0
    %v1268 = vpop.f32.mrb[0].mxu0
    %v1269 = vadd.f32 0.0, %v1268
    %v1270 = vpop.f32.mrb[0].mxu0
    %1271 = vmatprep.mubr.bf16.mxu0 0
    %1272 = vmatmul.mubr.bf16.gmra.mrb[0].mxu0 %v1138
    %v1273 = vpop.f32.mrb[0].mxu0
    %v1274 = vadd.f32 0.0, %v1273
    %v1275 = vpop.f32.mrb[0].mxu0
    %v1276 = vpop.f32.mrb[0].mxu0
    %v1277 = vadd.f32 0.0, %v1276
    %v1278 = vpop.f32.mrb[0].mxu0
    %1279 = vmatprep.mubr.bf16.mxu0 0
    %1280 = vmatmul.mubr.bf16.gmra.mrb[0].mxu0 %v1139
    %v1281 = vpop.f32.mrb[0].mxu0
    %v1282 = vadd.f32 0.0, %v1281
    %v1283 = vpop.f32.mrb[0].mxu0
    %v1284 = vpop.f32.mrb[0].mxu0
    %v1285 = vadd.f32 0.0, %v1284
    %v1286 = vpop.f32.mrb[0].mxu0
    %1287 = vmatprep.mubr.bf16.mxu0 0
    %1288 = vmatmul.mubr.bf16.gmra.mrb[0].mxu0 %v1140
    %v1289 = vpop.f32.mrb[0].mxu0
    %v1290 = vadd.f32 0.0, %v1289
    %v1291 = vpop.f32.mrb[0].mxu0
    %v1292 = vpop.f32.mrb[0].mxu0
    %v1293 = vadd.f32 0.0, %v1292
    %v1294 = vpop.f32.mrb[0].mxu0
    %1295 = vmatprep.mubr.bf16.mxu0 0
    %1296 = vmatmul.mubr.bf16.gmra.mrb[0].mxu0 %v1141
    %v1297 = vpop.f32.mrb[0].mxu0
    %v1298 = vadd.f32 0.0, %v1297
    %v1299 = vpop.f32.mrb[0].mxu0
    %v1300 = vpop.f32.mrb[0].mxu0
    %v1301 = vadd.f32 0.0, %v1300
    %v1302 = vpop.f32.mrb[0].mxu0
    %1303 = vmatprep.mubr.bf16.mxu0 0
    %1304 = vmatmul.mubr.bf16.gmra.mrb[0].mxu0 %v1142
    %v1305 = vpop.f32.mrb[0].mxu0
    %v1306 = vadd.f32 0.0, %v1305
    %v1307 = vpop.f32.mrb[0].mxu0
    %v1308 = vpop.f32.mrb[0].mxu0
    %v1309 = vadd.f32 0.0, %v1308
    %v1310 = vpop.f32.mrb[0].mxu0
    %1311 = vmatprep.mubr.bf16.mxu0 0
    %1312 = vmatmul.mubr.bf16.gmra.mrb[0].mxu0 %v1143
    %v1313 = vpop.f32.mrb[0].mxu0
    %v1314 = vadd.f32 0.0, %v1313
    %v1315 = vpop.f32.mrb[0].mxu0
    %v1316 = vpop.f32.mrb[0].mxu0
    %v1317 = vadd.f32 0.0, %v1316
    %v1318 = vpop.f32.mrb[0].mxu0
    %1319 = vmatprep.mubr.bf16.mxu0 0
    %1320 = vmatmul.mubr.bf16.gmra.mrb[0].mxu0 %v1144
    %v1321 = vpop.f32.mrb[0].mxu0
    %v1322 = vadd.f32 0.0, %v1321
    %v1323 = vpop.f32.mrb[0].mxu0
    %v1324 = vpop.f32.mrb[0].mxu0
    %v1325 = vadd.f32 0.0, %v1324
    %v1326 = vpop.f32.mrb[0].mxu0
    %1327 = vmatprep.mubr.bf16.mxu0 0
    %1328 = vmatmul.mubr.bf16.gmra.mrb[0].mxu0 %v1145
    %v1329 = vpop.f32.mrb[0].mxu0
    %v1330 = vadd.f32 0.0, %v1329
    %v1331 = vpop.f32.mrb[0].mxu0
    %v1332 = vpop.f32.mrb[0].mxu0
    %v1333 = vadd.f32 0.0, %v1332
    %v1334 = vpop.f32.mrb[0].mxu0
    %1335 = vmatprep.mubr.bf16.mxu0 0
    %1336 = vmatmul.mubr.bf16.gmra.mrb[0].mxu0 %v1146
    %v1337 = vpop.f32.mrb[0].mxu0
    %v1338 = vadd.f32 0.0, %v1337
    %v1339 = vpop.f32.mrb[0].mxu0
    %v1340 = vpop.f32.mrb[0].mxu0
    %v1341 = vadd.f32 0.0, %v1340
    %v1342 = vpop.f32.mrb[0].mxu0
    %1343 = vmatprep.mubr.bf16.mxu0 0
    %1344 = vmatmul.mubr.bf16.gmra.mrb[0].mxu0 %v1147
    %v1345 = vpop.f32.mrb[0].mxu0
    %v1346 = vadd.f32 0.0, %v1345
    %v1347 = vpop.f32.mrb[0].mxu0
    %v1348 = vpop.f32.mrb[0].mxu0
    %v1349 = vadd.f32 0.0, %v1348
    %v1350 = vpop.f32.mrb[0].mxu0
    %1351 = vmatprep.mubr.bf16.mxu0 0
    %1352 = vmatmul.mubr.bf16.gmra.mrb[0].mxu0 %v1148
    %v1353 = vpop.f32.mrb[0].mxu0
    %v1354 = vadd.f32 0.0, %v1353
    %v1355 = vpop.f32.mrb[0].mxu0
    %v1356 = vpop.f32.mrb[0].mxu0
    %v1357 = vadd.f32 0.0, %v1356
    %v1358 = vpop.f32.mrb[0].mxu0
    %1359 = vmatprep.mubr.bf16.mxu0 0
    %1360 = vmatmul.mubr.bf16.gmra.mrb[0].mxu0 %v1149
    %v1361 = vpop.f32.mrb[0].mxu0
    %v1362 = vadd.f32 0.0, %v1361
    %v1363 = vpop.f32.mrb[0].mxu0
    %v1364 = vpop.f32.mrb[0].mxu0
    %v1365 = vadd.f32 0.0, %v1364
    %v1366 = vpop.f32.mrb[0].mxu0
    %1367 = vmatprep.mubr.bf16.mxu0 0
    %1368 = vmatmul.mubr.bf16.gmra.mrb[0].mxu0 %v1150
    %v1369 = vpop.f32.mrb[0].mxu0
    %v1370 = vadd.f32 0.0, %v1369
    %v1371 = vpop.f32.mrb[0].mxu0
    %v1372 = vpop.f32.mrb[0].mxu0
    %v1373 = vadd.f32 0.0, %v1372
    %v1374 = vpop.f32.mrb[0].mxu0
    %1375 = vdwg.mxu0
    %v1376 = vpack.c.bf16 %v1253, %v1250
    %v1377 = vpack.c.bf16 %v1261, %v1258
    %v1378 = vpack.c.bf16 %v1269, %v1266
    %v1379 = vpack.c.bf16 %v1277, %v1274
    %v1380 = vpack.c.bf16 %v1285, %v1282
    %v1381 = vpack.c.bf16 %v1293, %v1290
    %v1382 = vpack.c.bf16 %v1301, %v1298
    %v1383 = vpack.c.bf16 %v1309, %v1306
    %v1384 = vpack.c.bf16 %v1317, %v1314
    %v1385 = vpack.c.bf16 %v1325, %v1322
    %v1386 = vpack.c.bf16 %v1333, %v1330
    %v1387 = vpack.c.bf16 %v1341, %v1338
    %v1388 = vpack.c.bf16 %v1349, %v1346
    %v1389 = vpack.c.bf16 %v1357, %v1354
    %v1390 = vpack.c.bf16 %v1365, %v1362
    %v1391 = vpack.c.bf16 %v1373, %v1370
    %v1408 = vunpack.c.l.b16 %v1376
    %v1409 = vunpack.c.h.b16 %v1376
    %v1410 = vunpack.c.l.b16 %v1377
    %v1411 = vunpack.c.h.b16 %v1377
    %v1412 = vunpack.c.l.b16 %v1378
    %v1413 = vunpack.c.h.b16 %v1378
    %v1414 = vunpack.c.l.b16 %v1379
    %v1415 = vunpack.c.h.b16 %v1379
    %v1416 = vunpack.c.l.b16 %v1380
    %v1417 = vunpack.c.h.b16 %v1380
    %v1418 = vunpack.c.l.b16 %v1381
    %v1419 = vunpack.c.h.b16 %v1381
    %v1420 = vunpack.c.l.b16 %v1382
    %v1421 = vunpack.c.h.b16 %v1382
    %v1422 = vunpack.c.l.b16 %v1383
    %v1423 = vunpack.c.h.b16 %v1383
    %v1424 = vunpack.c.l.b16 %v1384
    %v1425 = vunpack.c.h.b16 %v1384
    %v1426 = vunpack.c.l.b16 %v1385
    %v1427 = vunpack.c.h.b16 %v1385
    %v1428 = vunpack.c.l.b16 %v1386
    %v1429 = vunpack.c.h.b16 %v1386
    %v1430 = vunpack.c.l.b16 %v1387
    %v1431 = vunpack.c.h.b16 %v1387
    %v1432 = vunpack.c.l.b16 %v1388
    %v1433 = vunpack.c.h.b16 %v1388
    %v1434 = vunpack.c.l.b16 %v1389
    %v1435 = vunpack.c.h.b16 %v1389
    %v1436 = vunpack.c.l.b16 %v1390
    %v1437 = vunpack.c.h.b16 %v1390
    %v1438 = vunpack.c.l.b16 %v1391
    %v1439 = vunpack.c.h.b16 %v1391
    %v1440 = vpack.c.b16 %v1408, %v1408
    %v1441 = vpack.c.b16 %v1409, %v1409
    %v1442 = vpack.c.b16 %v1410, %v1410
    %v1443 = vpack.c.b16 %v1411, %v1411
    %v1444 = vpack.c.b16 %v1412, %v1412
    %v1445 = vpack.c.b16 %v1413, %v1413
    %v1446 = vpack.c.b16 %v1414, %v1414
    %v1447 = vpack.c.b16 %v1415, %v1415
    %v1448 = vpack.c.b16 %v1416, %v1416
    %v1449 = vpack.c.b16 %v1417, %v1417
    %v1450 = vpack.c.b16 %v1418, %v1418
    %v1451 = vpack.c.b16 %v1419, %v1419
    %v1452 = vpack.c.b16 %v1420, %v1420
    %v1453 = vpack.c.b16 %v1421, %v1421
    %v1454 = vpack.c.b16 %v1422, %v1422
    %v1455 = vpack.c.b16 %v1423, %v1423
    %v1456 = vpack.c.b16 %v1424, %v1424
    %v1457 = vpack.c.b16 %v1425, %v1425
    %v1458 = vpack.c.b16 %v1426, %v1426
    %v1459 = vpack.c.b16 %v1427, %v1427
    %v1460 = vpack.c.b16 %v1428, %v1428
    %v1461 = vpack.c.b16 %v1429, %v1429
    %v1462 = vpack.c.b16 %v1430, %v1430
    %v1463 = vpack.c.b16 %v1431, %v1431
    %v1464 = vpack.c.b16 %v1432, %v1432
    %v1465 = vpack.c.b16 %v1433, %v1433
    %v1466 = vpack.c.b16 %v1434, %v1434
    %v1467 = vpack.c.b16 %v1435, %v1435
    %v1468 = vpack.c.b16 %v1436, %v1436
    %v1469 = vpack.c.b16 %v1437, %v1437
    %v1470 = vpack.c.b16 %v1438, %v1438
    %v1471 = vpack.c.b16 %v1439, %v1439
    %1504 = vst [vmem:[#allocation2] sm:$0xf] %v1440
    %1505 = vst [vmem:[#allocation2 + $0x4] sm:$0xf] %v1441
    %1506 = vst [vmem:[#allocation2 + $0x8] sm:$0xf] %v1442
    %1507 = vst [vmem:[#allocation2 + $0xc] sm:$0xf] %v1443
    %1508 = vst [vmem:[#allocation2 + $0x10] sm:$0xf] %v1444
    %1509 = vst [vmem:[#allocation2 + $0x14] sm:$0xf] %v1445
    %1510 = vst [vmem:[#allocation2 + $0x18] sm:$0xf] %v1446
    %1511 = vst [vmem:[#allocation2 + $0x1c] sm:$0xf] %v1447
    %1512 = vst [vmem:[#allocation2 + $0x20] sm:$0xf] %v1448
    %1513 = vst [vmem:[#allocation2 + $0x24] sm:$0xf] %v1449
    %1514 = vst [vmem:[#allocation2 + $0x28] sm:$0xf] %v1450
    %1515 = vst [vmem:[#allocation2 + $0x2c] sm:$0xf] %v1451
    %1516 = vst [vmem:[#allocation2 + $0x30] sm:$0xf] %v1452
    %1517 = vst [vmem:[#allocation2 + $0x34] sm:$0xf] %v1453
    %1518 = vst [vmem:[#allocation2 + $0x38] sm:$0xf] %v1454
    %1519 = vst [vmem:[#allocation2 + $0x3c] sm:$0xf] %v1455
    %1520 = vst [vmem:[#allocation2 + $0x40] sm:$0xf] %v1456
    %1521 = vst [vmem:[#allocation2 + $0x44] sm:$0xf] %v1457
    %1522 = vst [vmem:[#allocation2 + $0x48] sm:$0xf] %v1458
    %1523 = vst [vmem:[#allocation2 + $0x4c] sm:$0xf] %v1459
    %1524 = vst [vmem:[#allocation2 + $0x50] sm:$0xf] %v1460
    %1525 = vst [vmem:[#allocation2 + $0x54] sm:$0xf] %v1461
    %1526 = vst [vmem:[#allocation2 + $0x58] sm:$0xf] %v1462
    %1527 = vst [vmem:[#allocation2 + $0x5c] sm:$0xf] %v1463
    %1528 = vst [vmem:[#allocation2 + $0x60] sm:$0xf] %v1464
    %1529 = vst [vmem:[#allocation2 + $0x64] sm:$0xf] %v1465
    %1530 = vst [vmem:[#allocation2 + $0x68] sm:$0xf] %v1466
    %1531 = vst [vmem:[#allocation2 + $0x6c] sm:$0xf] %v1467
    %1532 = vst [vmem:[#allocation2 + $0x70] sm:$0xf] %v1468
    %1533 = vst [vmem:[#allocation2 + $0x74] sm:$0xf] %v1469
    %1534 = vst [vmem:[#allocation2 + $0x78] sm:$0xf] %v1470
    %1535 = vst [vmem:[#allocation2 + $0x7c] sm:$0xf] %v1471
    // Predicated region
    $region10: #{tpu_custom_call.1} parent=1 // pred_check
      _
    $region11: #{tpu_custom_call.1} parent=1 // pred_check_branch
      %1537 = sbr.rel (0) target = $region13
    $region12: #{tpu_custom_call.1} parent=1 // pred_region
      %s1539 = ssub.s32 2048, 2048
      %1540 = vsyncadd [#allocation3], %s1539
      %s1541 = sshll.u32 [#allocation2], 4
      %s1542 = int_to_ptr.vmem [resolvable:$true] %s1541
      %1547 = dma.vmem_to_hbm [thread:$0]  %s1542, 2048, %s2, [#allocation3], 64, 64, 4
    $region13: #{tpu_custom_call.1} parent=1 // pred_fallthru
      _
    // Predicated region
    $region14: #{tpu_custom_call.1} parent=1 // pred_check
      _
    $region15: #{tpu_custom_call.1} parent=1 // pred_check_branch
      %1549 = sbr.rel (0) target = $region17
    $region16: #{tpu_custom_call.1} parent=1 // pred_region
      %1550 = dma.done [#allocation3], 2048
    $region17: #{tpu_custom_call.1} parent=1 // pred_fallthru
      _
    %1551 = vsyncpa [#allocation3], 1

</llo_original>
